<compile_context>
chip_gen: v5e
topology: v5e:2x2
jax: 0.10.0
libtpu: 0.0.40
codegen_flags: <defaults>
</compile_context>

<pallas_src>
import functools
import math

import jax
import jax.numpy as jnp
from jax import lax
from jax.experimental import pallas as pl
from jax.experimental.pallas import tpu as pltpu


# ----------------------------- Pallas kernel ---------------------------------
def decoder_layer_kernel(
    x_ref, fmx_ref,
    sa_wqkv_ref, sa_bqkv_ref, sa_wo_ref, sa_bo_ref,
    ca_wqkv_ref, ca_bqkv_ref, ca_wo_ref, ca_bo_ref,
    w1_ref, b1_ref, w2_ref, b2_ref,
    g1_ref, be1_ref, g2_ref, be2_ref, g3_ref, be3_ref,
    out_ref, attw_ref,
    *, batch, seq, n_heads,
):
    B, T, H = batch, seq, n_heads
    x = x_ref[...]                        # [M, D] f32, M = B*T
    fmx = fmx_ref[...]                    # [M, D] f32
    M, D = x.shape
    Dh = D // H
    scale = 1.0 / math.sqrt(Dh)
    bf16 = jnp.bfloat16

    # Additive block-diagonal mask (built once, shared by both attentions):
    # positions in the same batch block -> 0, cross-batch -> -1e30.
    # Built from iota comparisons only (no vector integer division).
    ri = lax.broadcasted_iota(jnp.int32, (M, M), 0)
    ci = lax.broadcasted_iota(jnp.int32, (M, M), 1)
    same_block = None
    for b in range(B):                    # B is small & static
        in_row = (ri >= b * T) & (ri < (b + 1) * T)
        in_col = (ci >= b * T) & (ci < (b + 1) * T)
        blk = in_row & in_col
        same_block = blk if same_block is None else (same_block | blk)
    attn_mask = jnp.where(same_block, 0.0, -1e30).astype(jnp.float32)

    def layer_norm(a, g, b):
        mu = jnp.mean(a, axis=-1, keepdims=True)
        var = jnp.mean((a - mu) ** 2, axis=-1, keepdims=True)
        return (a - mu) * lax.rsqrt(var + 1e-5) * g + b

    def attention(q, k, v, wo_bf, bo):
        # q, k, v: [M, D] f32; all batches processed at once per head, kept
        # independent by the block-diagonal mask.
        q_bf = (q * scale).astype(bf16)   # fold 1/sqrt(Dh) into q once
        k_bf = k.astype(bf16)
        v_bf = v.astype(bf16)
        acc = jnp.zeros((M, D), jnp.float32)   # out-projection accumulator
        aw = jnp.zeros((M, M), jnp.float32)    # head-sum of attn probabilities
        for h in range(H):                     # static unroll over heads
            c0 = h * Dh
            s = lax.dot_general(q_bf[:, c0:c0 + Dh], k_bf[:, c0:c0 + Dh],
                                (((1,), (1,)), ((), ())),
                                preferred_element_type=jnp.float32)
            s = s + attn_mask
            s = s - jnp.max(s, axis=-1, keepdims=True)
            p = jnp.exp(s)
            # Exact normalization so the returned maps sum to exactly 1.
            p = p / jnp.sum(p, axis=-1, keepdims=True)
            aw = aw + p
            oh = jnp.dot(p.astype(bf16), v_bf[:, c0:c0 + Dh],
                         preferred_element_type=jnp.float32)
            # Direct out-projection accumulation (no lane-axis concat).
            acc = acc + jnp.dot(oh.astype(bf16), wo_bf[c0:c0 + Dh, :],
                                preferred_element_type=jnp.float32)
        return acc + bo, aw * (1.0 / H)        # average_attn_weights=True

    # ---- self-attention block (fused QKV projection; dropout = identity) ----
    h1 = layer_norm(x, g1_ref[...], be1_ref[...])
    qkv = jnp.dot(h1.astype(bf16), sa_wqkv_ref[...],
                  preferred_element_type=jnp.float32) + sa_bqkv_ref[...]
    sa_out, sa_w = attention(qkv[:, 0:D], qkv[:, D:2 * D], qkv[:, 2 * D:3 * D],
                             sa_wo_ref[...], sa_bo_ref[...])
    x1 = x + sa_out

    # ---- cross-attention: Q from normed x1, fused K/V from freq-masked x ----
    h2 = layer_norm(x1, g2_ref[...], be2_ref[...])
    ca_wqkv = ca_wqkv_ref[...]
    q = jnp.dot(h2.astype(bf16), ca_wqkv[:, 0:D],
                preferred_element_type=jnp.float32) + ca_bqkv_ref[:, 0:D]
    kv = jnp.dot(fmx.astype(bf16), ca_wqkv[:, D:3 * D],
                 preferred_element_type=jnp.float32) + ca_bqkv_ref[:, D:3 * D]
    ca_out, ca_w = attention(q, kv[:, 0:D], kv[:, D:2 * D],
                             ca_wo_ref[...], ca_bo_ref[...])
    x2 = x1 + ca_out

    # ---- feed-forward block ----
    h3 = layer_norm(x2, g3_ref[...], be3_ref[...])
    ff = jnp.dot(h3.astype(bf16), w1_ref[...],
                 preferred_element_type=jnp.float32) + b1_ref[...]
    ff = jnp.maximum(ff, 0.0)
    ff = jnp.dot(ff.astype(bf16), w2_ref[...],
                 preferred_element_type=jnp.float32) + b2_ref[...]

    out_ref[...] = (x2 + ff).astype(out_ref.dtype)

    # Packed attention weights: cols [0,T) = self-attn, [T,2T) = cross-attn.
    # Per-batch diagonal blocks extracted with static slices; each store is a
    # full-lane-width row block of the packed output slab.
    for b in range(B):
        r0 = b * T
        attw_ref[r0:r0 + T, :] = jnp.concatenate(
            [sa_w[r0:r0 + T, r0:r0 + T], ca_w[r0:r0 + T, r0:r0 + T]], axis=1)


# ----------------------------- wrapper ---------------------------------------
def decoder_layer_forward(x, fmx, params, n_heads):
    B, T, D = x.shape
    M = B * T
    x2d = x.reshape(M, D)
    fmx2d = fmx.reshape(M, D)

    param_order = [
        "sa_wqkv_t", "sa_bqkv", "sa_wo_t", "sa_bo",
        "ca_wqkv_t", "ca_bqkv", "ca_wo_t", "ca_bo",
        "w1_t", "b1", "w2_t", "b2",
        "g1", "be1", "g2", "be2", "g3", "be3",
    ]
    # Weight matrices go to the MXU in bf16; biases / LN params stay f32.
    weight_keys = {"sa_wqkv_t", "sa_wo_t", "ca_wqkv_t", "ca_wo_t",
                   "w1_t", "w2_t"}
    param_list = [params[k].astype(jnp.bfloat16) if k in weight_keys
                  else params[k] for k in param_order]

    kernel = functools.partial(decoder_layer_kernel,
                               batch=B, seq=T, n_heads=n_heads)
    out2d, attw = pl.pallas_call(
        kernel,
        out_shape=(jax.ShapeDtypeStruct((M, D), jnp.float32),
                   jax.ShapeDtypeStruct((M, 2 * T), jnp.float32)),
        # No grid: single invocation, every operand resident in VMEM exactly
        # once (no double-buffering of the 18 constant weight/bias operands).
        compiler_params=pltpu.CompilerParams(
            vmem_limit_bytes=64 * 1024 * 1024),
    )(x2d, fmx2d, *param_list)

    out = out2d.reshape(B, T, D)
    attw = attw.reshape(B, T, 2 * T)
    return out, (attw[:, :, :T], attw[:, :, T:])


# ----------------------------- parameter init --------------------------------
def init_params(key, d_model, n_heads, dim_fc):
    ks = jax.random.split(key, 16)
    s = 0.05
    f32 = jnp.float32
    return {
        # self-attention (weights stored pre-transposed: [in, out])
        "sa_wqkv_t": (jax.random.normal(ks[0], (d_model, 3 * d_model), f32) * s),
        "sa_bqkv":   (jax.random.normal(ks[1], (1, 3 * d_model), f32) * s),
        "sa_wo_t":   (jax.random.normal(ks[2], (d_model, d_model), f32) * s),
        "sa_bo":     (jax.random.normal(ks[3], (1, d_model), f32) * s),
        # cross-attention
        "ca_wqkv_t": (jax.random.normal(ks[4], (d_model, 3 * d_model), f32) * s),
        "ca_bqkv":   (jax.random.normal(ks[5], (1, 3 * d_model), f32) * s),
        "ca_wo_t":   (jax.random.normal(ks[6], (d_model, d_model), f32) * s),
        "ca_bo":     (jax.random.normal(ks[7], (1, d_model), f32) * s),
        # feed-forward
        "w1_t": (jax.random.normal(ks[8], (d_model, dim_fc), f32) * s),
        "b1":   (jax.random.normal(ks[9], (1, dim_fc), f32) * s),
        "w2_t": (jax.random.normal(ks[10], (dim_fc, d_model), f32) * s),
        "b2":   (jax.random.normal(ks[11], (1, d_model), f32) * s),
        # layer norms
        "g1":  1.0 + jax.random.normal(ks[12], (1, d_model), f32) * s,
        "be1": jax.random.normal(ks[13], (1, d_model), f32) * s,
        "g2":  1.0 + jax.random.normal(ks[14], (1, d_model), f32) * s,
        "be2": jax.random.normal(ks[15], (1, d_model), f32) * s,
        "g3":  jnp.ones((1, d_model), f32),
        "be3": jnp.zeros((1, d_model), f32),
    }


# ----------------------------- pure-JAX reference (f32) ----------------------
def reference_forward(x, fmx, p, n_heads):
    def ln(h, g, b):
        mu = h.mean(-1, keepdims=True)
        var = ((h - mu) ** 2).mean(-1, keepdims=True)
        return (h - mu) / jnp.sqrt(var + 1e-5) * g + b

    def mha(q_in, kv_in, wqkv_t, bqkv, wo_t, bo):
        B, T, D = q_in.shape
        S = kv_in.shape[1]
        H = n_heads
        Dh = D // H
        q = q_in @ wqkv_t[:, :D] + bqkv[0, :D]
        k = kv_in @ wqkv_t[:, D:2 * D] + bqkv[0, D:2 * D]
        v = kv_in @ wqkv_t[:, 2 * D:] + bqkv[0, 2 * D:]
        qh = q.reshape(B, T, H, Dh).transpose(0, 2, 1, 3)
        kh = k.reshape(B, S, H, Dh).transpose(0, 2, 1, 3)
        vh = v.reshape(B, S, H, Dh).transpose(0, 2, 1, 3)
        scr = jnp.einsum("bhtd,bhsd->bhts", qh, kh) / math.sqrt(Dh)
        pw = jax.nn.softmax(scr, axis=-1)
        o = jnp.einsum("bhts,bhsd->bhtd", pw, vh).transpose(0, 2, 1, 3)
        o = o.reshape(B, T, D)
        return o @ wo_t + bo[0], pw.mean(axis=1)

    h1 = ln(x, p["g1"], p["be1"])
    sa, w_sa = mha(h1, h1, p["sa_wqkv_t"], p["sa_bqkv"], p["sa_wo_t"], p["sa_bo"])
    x1 = x + sa
    h2 = ln(x1, p["g2"], p["be2"])
    ca, w_ca = mha(h2, fmx, p["ca_wqkv_t"], p["ca_bqkv"], p["ca_wo_t"], p["ca_bo"])
    x2 = x1 + ca
    h3 = ln(x2, p["g3"], p["be3"])
    ff = jnp.maximum(h3 @ p["w1_t"] + p["b1"][0], 0.0) @ p["w2_t"] + p["b2"][0]
    return x2 + ff, (w_sa, w_ca)


# ----------------------------- main -------------------------------------------
if __name__ == "__main__":
    B, T, D = 2, 8, 32
    n_heads = 4
    dim_fc = 64

    key = jax.random.PRNGKey(0)
    kx, kf, kp = jax.random.split(key, 3)
    x = jax.random.normal(kx, (B, T, D), jnp.float32)
    fmx = jax.random.normal(kf, (B, T, D), jnp.float32)
    params = init_params(kp, D, n_heads, dim_fc)

    out, (saw, caw) = decoder_layer_forward(x, fmx, params, n_heads)
    out = jax.block_until_ready(out)
    saw = jax.block_until_ready(saw)
    caw = jax.block_until_ready(caw)

    ref_out, (ref_saw, ref_caw) = reference_forward(x, fmx, params, n_heads)

    # Tolerances account for bf16 MXU operands vs. the pure-f32 reference.
    assert jnp.allclose(out, ref_out, atol=2e-2, rtol=2e-2)
    assert jnp.allclose(saw, ref_saw, atol=5e-3, rtol=5e-3)
    assert jnp.allclose(caw, ref_caw, atol=5e-3, rtol=5e-3)

    print("KERNEL_OK")
</pallas_src>

<mosaic_0001>
module attributes {stable_mosaic.version = 11 : i64} {
  func.func @decoder_layer_kernel(%arg0: memref<16x32xf32, #tpu.memory_space<vmem>>, %arg1: memref<16x32xf32, #tpu.memory_space<vmem>>, %arg2: memref<32x96xbf16, #tpu.memory_space<vmem>>, %arg3: memref<1x96xf32, #tpu.memory_space<vmem>>, %arg4: memref<32x32xbf16, #tpu.memory_space<vmem>>, %arg5: memref<1x32xf32, #tpu.memory_space<vmem>>, %arg6: memref<32x96xbf16, #tpu.memory_space<vmem>>, %arg7: memref<1x96xf32, #tpu.memory_space<vmem>>, %arg8: memref<32x32xbf16, #tpu.memory_space<vmem>>, %arg9: memref<1x32xf32, #tpu.memory_space<vmem>>, %arg10: memref<32x64xbf16, #tpu.memory_space<vmem>>, %arg11: memref<1x64xf32, #tpu.memory_space<vmem>>, %arg12: memref<64x32xbf16, #tpu.memory_space<vmem>>, %arg13: memref<1x32xf32, #tpu.memory_space<vmem>>, %arg14: memref<1x32xf32, #tpu.memory_space<vmem>>, %arg15: memref<1x32xf32, #tpu.memory_space<vmem>>, %arg16: memref<1x32xf32, #tpu.memory_space<vmem>>, %arg17: memref<1x32xf32, #tpu.memory_space<vmem>>, %arg18: memref<1x32xf32, #tpu.memory_space<vmem>>, %arg19: memref<1x32xf32, #tpu.memory_space<vmem>>, %arg20: memref<16x32xf32, #tpu.memory_space<vmem>>, %arg21: memref<16x16xf32, #tpu.memory_space<vmem>>) attributes {dimension_semantics = [], scalar_prefetch = 0 : i64, scratch_operands = 0 : i64, tpu.core_type = #tpu.core_type<tc>} {
    %c0 = arith.constant 0 : index
    %c0_0 = arith.constant 0 : index
    %0 = vector.load %arg0[%c0, %c0_0] : memref<16x32xf32, #tpu.memory_space<vmem>>, vector<16x32xf32>
    %c0_1 = arith.constant 0 : index
    %c0_2 = arith.constant 0 : index
    %1 = vector.load %arg1[%c0_1, %c0_2] : memref<16x32xf32, #tpu.memory_space<vmem>>, vector<16x32xf32>
    %2 = tpu.iota {dimensions = array<i32: 0>} : vector<16x16xi32>
    %3 = tpu.iota {dimensions = array<i32: 1>} : vector<16x16xi32>
    %c0_i32 = arith.constant 0 : i32
    %4 = vector.broadcast %c0_i32 : i32 to vector<16x16xi32>
    %5 = arith.cmpi sge, %2, %4 : vector<16x16xi32>
    %c8_i32 = arith.constant 8 : i32
    %6 = vector.broadcast %c8_i32 : i32 to vector<16x16xi32>
    %7 = arith.cmpi slt, %2, %6 : vector<16x16xi32>
    %8 = arith.andi %5, %7 : vector<16x16xi1>
    %c0_i32_3 = arith.constant 0 : i32
    %9 = vector.broadcast %c0_i32_3 : i32 to vector<16x16xi32>
    %10 = arith.cmpi sge, %3, %9 : vector<16x16xi32>
    %c8_i32_4 = arith.constant 8 : i32
    %11 = vector.broadcast %c8_i32_4 : i32 to vector<16x16xi32>
    %12 = arith.cmpi slt, %3, %11 : vector<16x16xi32>
    %13 = arith.andi %10, %12 : vector<16x16xi1>
    %14 = arith.andi %8, %13 : vector<16x16xi1>
    %c8_i32_5 = arith.constant 8 : i32
    %15 = vector.broadcast %c8_i32_5 : i32 to vector<16x16xi32>
    %16 = arith.cmpi sge, %2, %15 : vector<16x16xi32>
    %c16_i32 = arith.constant 16 : i32
    %17 = vector.broadcast %c16_i32 : i32 to vector<16x16xi32>
    %18 = arith.cmpi slt, %2, %17 : vector<16x16xi32>
    %19 = arith.andi %16, %18 : vector<16x16xi1>
    %c8_i32_6 = arith.constant 8 : i32
    %20 = vector.broadcast %c8_i32_6 : i32 to vector<16x16xi32>
    %21 = arith.cmpi sge, %3, %20 : vector<16x16xi32>
    %c16_i32_7 = arith.constant 16 : i32
    %22 = vector.broadcast %c16_i32_7 : i32 to vector<16x16xi32>
    %23 = arith.cmpi slt, %3, %22 : vector<16x16xi32>
    %24 = arith.andi %21, %23 : vector<16x16xi1>
    %25 = arith.andi %19, %24 : vector<16x16xi1>
    %26 = arith.ori %14, %25 : vector<16x16xi1>
    %cst = arith.constant 0.000000e+00 : f32
    %cst_8 = arith.constant -1.000000e+30 : f32
    %27 = vector.broadcast %cst : f32 to vector<16x16xf32>
    %28 = vector.broadcast %cst_8 : f32 to vector<16x16xf32>
    %29 = arith.select %26, %27, %28 : vector<16x16xi1>, vector<16x16xf32>
    %c0_9 = arith.constant 0 : index
    %c0_10 = arith.constant 0 : index
    %30 = vector.load %arg14[%c0_9, %c0_10] : memref<1x32xf32, #tpu.memory_space<vmem>>, vector<1x32xf32>
    %c0_11 = arith.constant 0 : index
    %c0_12 = arith.constant 0 : index
    %31 = vector.load %arg15[%c0_11, %c0_12] : memref<1x32xf32, #tpu.memory_space<vmem>>, vector<1x32xf32>
    %cst_13 = arith.constant dense<0.000000e+00> : vector<16xf32>
    %32 = vector.multi_reduction <add>, %0, %cst_13 [1] : vector<16x32xf32> to vector<16xf32>
    %33 = vector.shape_cast %32 : vector<16xf32> to vector<16x1xf32>
    %cst_14 = arith.constant 3.200000e+01 : f32
    %34 = vector.broadcast %cst_14 : f32 to vector<16x1xf32>
    %35 = arith.divf %33, %34 : vector<16x1xf32>
    %36 = vector.broadcast %35 : vector<16x1xf32> to vector<16x32xf32>
    %37 = arith.subf %0, %36 : vector<16x32xf32>
    %38 = arith.mulf %37, %37 : vector<16x32xf32>
    %cst_15 = arith.constant dense<0.000000e+00> : vector<16xf32>
    %39 = vector.multi_reduction <add>, %38, %cst_15 [1] : vector<16x32xf32> to vector<16xf32>
    %40 = vector.shape_cast %39 : vector<16xf32> to vector<16x1xf32>
    %cst_16 = arith.constant 3.200000e+01 : f32
    %41 = vector.broadcast %cst_16 : f32 to vector<16x1xf32>
    %42 = arith.divf %40, %41 : vector<16x1xf32>
    %43 = vector.broadcast %35 : vector<16x1xf32> to vector<16x32xf32>
    %44 = arith.subf %0, %43 : vector<16x32xf32>
    %cst_17 = arith.constant 9.99999974E-6 : f32
    %45 = vector.broadcast %cst_17 : f32 to vector<16x1xf32>
    %46 = arith.addf %42, %45 : vector<16x1xf32>
    %47 = math.rsqrt %46 : vector<16x1xf32>
    %48 = vector.broadcast %47 : vector<16x1xf32> to vector<16x32xf32>
    %49 = arith.mulf %44, %48 : vector<16x32xf32>
    %50 = vector.broadcast %30 : vector<1x32xf32> to vector<16x32xf32>
    %51 = arith.mulf %49, %50 : vector<16x32xf32>
    %52 = vector.broadcast %31 : vector<1x32xf32> to vector<16x32xf32>
    %53 = arith.addf %51, %52 : vector<16x32xf32>
    %54 = arith.truncf %53 : vector<16x32xf32> to vector<16x32xbf16>
    %c0_18 = arith.constant 0 : index
    %c0_19 = arith.constant 0 : index
    %55 = vector.load %arg2[%c0_18, %c0_19] : memref<32x96xbf16, #tpu.memory_space<vmem>>, vector<32x96xbf16>
    %cst_20 = arith.constant dense<0.000000e+00> : vector<16x96xf32>
    %56 = tpu.matmul %54, %55, %cst_20 {dimension_numbers = #tpu.dot_dimension_numbers<[1], [0], [0], [1], [0, 0, 1, 1], [], []>} : vector<16x32xbf16>, vector<32x96xbf16>, vector<16x96xf32> -> vector<16x96xf32>
    %c0_21 = arith.constant 0 : index
    %c0_22 = arith.constant 0 : index
    %57 = vector.load %arg3[%c0_21, %c0_22] : memref<1x96xf32, #tpu.memory_space<vmem>>, vector<1x96xf32>
    %58 = vector.broadcast %57 : vector<1x96xf32> to vector<16x96xf32>
    %59 = arith.addf %56, %58 : vector<16x96xf32>
    %60 = vector.extract_strided_slice %59 {offsets = [0, 0], sizes = [16, 32], strides = [1, 1]} : vector<16x96xf32> to vector<16x32xf32>
    %61 = vector.extract_strided_slice %59 {offsets = [0, 32], sizes = [16, 32], strides = [1, 1]} : vector<16x96xf32> to vector<16x32xf32>
    %62 = vector.extract_strided_slice %59 {offsets = [0, 64], sizes = [16, 32], strides = [1, 1]} : vector<16x96xf32> to vector<16x32xf32>
    %c0_23 = arith.constant 0 : index
    %c0_24 = arith.constant 0 : index
    %63 = vector.load %arg4[%c0_23, %c0_24] : memref<32x32xbf16, #tpu.memory_space<vmem>>, vector<32x32xbf16>
    %c0_25 = arith.constant 0 : index
    %c0_26 = arith.constant 0 : index
    %64 = vector.load %arg5[%c0_25, %c0_26] : memref<1x32xf32, #tpu.memory_space<vmem>>, vector<1x32xf32>
    %cst_27 = arith.constant 0.353553385 : f32
    %65 = vector.broadcast %cst_27 : f32 to vector<16x32xf32>
    %66 = arith.mulf %60, %65 : vector<16x32xf32>
    %67 = arith.truncf %66 : vector<16x32xf32> to vector<16x32xbf16>
    %68 = arith.truncf %61 : vector<16x32xf32> to vector<16x32xbf16>
    %69 = arith.truncf %62 : vector<16x32xf32> to vector<16x32xbf16>
    %cst_28 = arith.constant 0.000000e+00 : f32
    %70 = vector.broadcast %cst_28 : f32 to vector<16x32xf32>
    %cst_29 = arith.constant 0.000000e+00 : f32
    %71 = vector.broadcast %cst_29 : f32 to vector<16x16xf32>
    %72 = vector.extract_strided_slice %67 {offsets = [0, 0], sizes = [16, 8], strides = [1, 1]} : vector<16x32xbf16> to vector<16x8xbf16>
    %73 = vector.extract_strided_slice %68 {offsets = [0, 0], sizes = [16, 8], strides = [1, 1]} : vector<16x32xbf16> to vector<16x8xbf16>
    %cst_30 = arith.constant dense<0.000000e+00> : vector<16x16xf32>
    %74 = tpu.matmul %72, %73, %cst_30 {dimension_numbers = #tpu.dot_dimension_numbers<[1], [1], [0], [0], [0, 0, 1, 0], [], []>} : vector<16x8xbf16>, vector<16x8xbf16>, vector<16x16xf32> -> vector<16x16xf32>
    %75 = arith.addf %74, %29 : vector<16x16xf32>
    %cst_31 = arith.constant dense<0xFF800000> : vector<16xf32>
    %76 = vector.multi_reduction <maximumf>, %75, %cst_31 [1] : vector<16x16xf32> to vector<16xf32>
    %77 = vector.shape_cast %76 : vector<16xf32> to vector<16x1xf32>
    %78 = vector.broadcast %77 : vector<16x1xf32> to vector<16x16xf32>
    %79 = arith.subf %75, %78 : vector<16x16xf32>
    %80 = math.exp %79 : vector<16x16xf32>
    %cst_32 = arith.constant dense<0.000000e+00> : vector<16xf32>
    %81 = vector.multi_reduction <add>, %80, %cst_32 [1] : vector<16x16xf32> to vector<16xf32>
    %82 = vector.shape_cast %81 : vector<16xf32> to vector<16x1xf32>
    %83 = vector.broadcast %82 : vector<16x1xf32> to vector<16x16xf32>
    %84 = arith.divf %80, %83 : vector<16x16xf32>
    %85 = arith.addf %71, %84 : vector<16x16xf32>
    %86 = arith.truncf %84 : vector<16x16xf32> to vector<16x16xbf16>
    %87 = vector.extract_strided_slice %69 {offsets = [0, 0], sizes = [16, 8], strides = [1, 1]} : vector<16x32xbf16> to vector<16x8xbf16>
    %cst_33 = arith.constant dense<0.000000e+00> : vector<16x8xf32>
    %88 = tpu.matmul %86, %87, %cst_33 {dimension_numbers = #tpu.dot_dimension_numbers<[1], [0], [0], [1], [0, 0, 1, 1], [], []>} : vector<16x16xbf16>, vector<16x8xbf16>, vector<16x8xf32> -> vector<16x8xf32>
    %89 = arith.truncf %88 : vector<16x8xf32> to vector<16x8xbf16>
    %90 = vector.extract_strided_slice %63 {offsets = [0, 0], sizes = [8, 32], strides = [1, 1]} : vector<32x32xbf16> to vector<8x32xbf16>
    %cst_34 = arith.constant dense<0.000000e+00> : vector<16x32xf32>
    %91 = tpu.matmul %89, %90, %cst_34 {dimension_numbers = #tpu.dot_dimension_numbers<[1], [0], [0], [1], [0, 0, 1, 1], [], []>} : vector<16x8xbf16>, vector<8x32xbf16>, vector<16x32xf32> -> vector<16x32xf32>
    %92 = arith.addf %70, %91 : vector<16x32xf32>
    %93 = vector.extract_strided_slice %67 {offsets = [0, 8], sizes = [16, 8], strides = [1, 1]} : vector<16x32xbf16> to vector<16x8xbf16>
    %94 = vector.extract_strided_slice %68 {offsets = [0, 8], sizes = [16, 8], strides = [1, 1]} : vector<16x32xbf16> to vector<16x8xbf16>
    %cst_35 = arith.constant dense<0.000000e+00> : vector<16x16xf32>
    %95 = tpu.matmul %93, %94, %cst_35 {dimension_numbers = #tpu.dot_dimension_numbers<[1], [1], [0], [0], [0, 0, 1, 0], [], []>} : vector<16x8xbf16>, vector<16x8xbf16>, vector<16x16xf32> -> vector<16x16xf32>
    %96 = arith.addf %95, %29 : vector<16x16xf32>
    %cst_36 = arith.constant dense<0xFF800000> : vector<16xf32>
    %97 = vector.multi_reduction <maximumf>, %96, %cst_36 [1] : vector<16x16xf32> to vector<16xf32>
    %98 = vector.shape_cast %97 : vector<16xf32> to vector<16x1xf32>
    %99 = vector.broadcast %98 : vector<16x1xf32> to vector<16x16xf32>
    %100 = arith.subf %96, %99 : vector<16x16xf32>
    %101 = math.exp %100 : vector<16x16xf32>
    %cst_37 = arith.constant dense<0.000000e+00> : vector<16xf32>
    %102 = vector.multi_reduction <add>, %101, %cst_37 [1] : vector<16x16xf32> to vector<16xf32>
    %103 = vector.shape_cast %102 : vector<16xf32> to vector<16x1xf32>
    %104 = vector.broadcast %103 : vector<16x1xf32> to vector<16x16xf32>
    %105 = arith.divf %101, %104 : vector<16x16xf32>
    %106 = arith.addf %85, %105 : vector<16x16xf32>
    %107 = arith.truncf %105 : vector<16x16xf32> to vector<16x16xbf16>
    %108 = vector.extract_strided_slice %69 {offsets = [0, 8], sizes = [16, 8], strides = [1, 1]} : vector<16x32xbf16> to vector<16x8xbf16>
    %cst_38 = arith.constant dense<0.000000e+00> : vector<16x8xf32>
    %109 = tpu.matmul %107, %108, %cst_38 {dimension_numbers = #tpu.dot_dimension_numbers<[1], [0], [0], [1], [0, 0, 1, 1], [], []>} : vector<16x16xbf16>, vector<16x8xbf16>, vector<16x8xf32> -> vector<16x8xf32>
    %110 = arith.truncf %109 : vector<16x8xf32> to vector<16x8xbf16>
    %111 = vector.extract_strided_slice %63 {offsets = [8, 0], sizes = [8, 32], strides = [1, 1]} : vector<32x32xbf16> to vector<8x32xbf16>
    %cst_39 = arith.constant dense<0.000000e+00> : vector<16x32xf32>
    %112 = tpu.matmul %110, %111, %cst_39 {dimension_numbers = #tpu.dot_dimension_numbers<[1], [0], [0], [1], [0, 0, 1, 1], [], []>} : vector<16x8xbf16>, vector<8x32xbf16>, vector<16x32xf32> -> vector<16x32xf32>
    %113 = arith.addf %92, %112 : vector<16x32xf32>
    %114 = vector.extract_strided_slice %67 {offsets = [0, 16], sizes = [16, 8], strides = [1, 1]} : vector<16x32xbf16> to vector<16x8xbf16>
    %115 = vector.extract_strided_slice %68 {offsets = [0, 16], sizes = [16, 8], strides = [1, 1]} : vector<16x32xbf16> to vector<16x8xbf16>
    %cst_40 = arith.constant dense<0.000000e+00> : vector<16x16xf32>
    %116 = tpu.matmul %114, %115, %cst_40 {dimension_numbers = #tpu.dot_dimension_numbers<[1], [1], [0], [0], [0, 0, 1, 0], [], []>} : vector<16x8xbf16>, vector<16x8xbf16>, vector<16x16xf32> -> vector<16x16xf32>
    %117 = arith.addf %116, %29 : vector<16x16xf32>
    %cst_41 = arith.constant dense<0xFF800000> : vector<16xf32>
    %118 = vector.multi_reduction <maximumf>, %117, %cst_41 [1] : vector<16x16xf32> to vector<16xf32>
    %119 = vector.shape_cast %118 : vector<16xf32> to vector<16x1xf32>
    %120 = vector.broadcast %119 : vector<16x1xf32> to vector<16x16xf32>
    %121 = arith.subf %117, %120 : vector<16x16xf32>
    %122 = math.exp %121 : vector<16x16xf32>
    %cst_42 = arith.constant dense<0.000000e+00> : vector<16xf32>
    %123 = vector.multi_reduction <add>, %122, %cst_42 [1] : vector<16x16xf32> to vector<16xf32>
    %124 = vector.shape_cast %123 : vector<16xf32> to vector<16x1xf32>
    %125 = vector.broadcast %124 : vector<16x1xf32> to vector<16x16xf32>
    %126 = arith.divf %122, %125 : vector<16x16xf32>
    %127 = arith.addf %106, %126 : vector<16x16xf32>
    %128 = arith.truncf %126 : vector<16x16xf32> to vector<16x16xbf16>
    %129 = vector.extract_strided_slice %69 {offsets = [0, 16], sizes = [16, 8], strides = [1, 1]} : vector<16x32xbf16> to vector<16x8xbf16>
    %cst_43 = arith.constant dense<0.000000e+00> : vector<16x8xf32>
    %130 = tpu.matmul %128, %129, %cst_43 {dimension_numbers = #tpu.dot_dimension_numbers<[1], [0], [0], [1], [0, 0, 1, 1], [], []>} : vector<16x16xbf16>, vector<16x8xbf16>, vector<16x8xf32> -> vector<16x8xf32>
    %131 = arith.truncf %130 : vector<16x8xf32> to vector<16x8xbf16>
    %132 = vector.extract_strided_slice %63 {offsets = [16, 0], sizes = [8, 32], strides = [1, 1]} : vector<32x32xbf16> to vector<8x32xbf16>
    %cst_44 = arith.constant dense<0.000000e+00> : vector<16x32xf32>
    %133 = tpu.matmul %131, %132, %cst_44 {dimension_numbers = #tpu.dot_dimension_numbers<[1], [0], [0], [1], [0, 0, 1, 1], [], []>} : vector<16x8xbf16>, vector<8x32xbf16>, vector<16x32xf32> -> vector<16x32xf32>
    %134 = arith.addf %113, %133 : vector<16x32xf32>
    %135 = vector.extract_strided_slice %67 {offsets = [0, 24], sizes = [16, 8], strides = [1, 1]} : vector<16x32xbf16> to vector<16x8xbf16>
    %136 = vector.extract_strided_slice %68 {offsets = [0, 24], sizes = [16, 8], strides = [1, 1]} : vector<16x32xbf16> to vector<16x8xbf16>
    %cst_45 = arith.constant dense<0.000000e+00> : vector<16x16xf32>
    %137 = tpu.matmul %135, %136, %cst_45 {dimension_numbers = #tpu.dot_dimension_numbers<[1], [1], [0], [0], [0, 0, 1, 0], [], []>} : vector<16x8xbf16>, vector<16x8xbf16>, vector<16x16xf32> -> vector<16x16xf32>
    %138 = arith.addf %137, %29 : vector<16x16xf32>
    %cst_46 = arith.constant dense<0xFF800000> : vector<16xf32>
    %139 = vector.multi_reduction <maximumf>, %138, %cst_46 [1] : vector<16x16xf32> to vector<16xf32>
    %140 = vector.shape_cast %139 : vector<16xf32> to vector<16x1xf32>
    %141 = vector.broadcast %140 : vector<16x1xf32> to vector<16x16xf32>
    %142 = arith.subf %138, %141 : vector<16x16xf32>
    %143 = math.exp %142 : vector<16x16xf32>
    %cst_47 = arith.constant dense<0.000000e+00> : vector<16xf32>
    %144 = vector.multi_reduction <add>, %143, %cst_47 [1] : vector<16x16xf32> to vector<16xf32>
    %145 = vector.shape_cast %144 : vector<16xf32> to vector<16x1xf32>
    %146 = vector.broadcast %145 : vector<16x1xf32> to vector<16x16xf32>
    %147 = arith.divf %143, %146 : vector<16x16xf32>
    %148 = arith.addf %127, %147 : vector<16x16xf32>
    %149 = arith.truncf %147 : vector<16x16xf32> to vector<16x16xbf16>
    %150 = vector.extract_strided_slice %69 {offsets = [0, 24], sizes = [16, 8], strides = [1, 1]} : vector<16x32xbf16> to vector<16x8xbf16>
    %cst_48 = arith.constant dense<0.000000e+00> : vector<16x8xf32>
    %151 = tpu.matmul %149, %150, %cst_48 {dimension_numbers = #tpu.dot_dimension_numbers<[1], [0], [0], [1], [0, 0, 1, 1], [], []>} : vector<16x16xbf16>, vector<16x8xbf16>, vector<16x8xf32> -> vector<16x8xf32>
    %152 = arith.truncf %151 : vector<16x8xf32> to vector<16x8xbf16>
    %153 = vector.extract_strided_slice %63 {offsets = [24, 0], sizes = [8, 32], strides = [1, 1]} : vector<32x32xbf16> to vector<8x32xbf16>
    %cst_49 = arith.constant dense<0.000000e+00> : vector<16x32xf32>
    %154 = tpu.matmul %152, %153, %cst_49 {dimension_numbers = #tpu.dot_dimension_numbers<[1], [0], [0], [1], [0, 0, 1, 1], [], []>} : vector<16x8xbf16>, vector<8x32xbf16>, vector<16x32xf32> -> vector<16x32xf32>
    %155 = arith.addf %134, %154 : vector<16x32xf32>
    %156 = vector.broadcast %64 : vector<1x32xf32> to vector<16x32xf32>
    %157 = arith.addf %155, %156 : vector<16x32xf32>
    %cst_50 = arith.constant 2.500000e-01 : f32
    %158 = vector.broadcast %cst_50 : f32 to vector<16x16xf32>
    %159 = arith.mulf %148, %158 : vector<16x16xf32>
    %160 = arith.addf %0, %157 : vector<16x32xf32>
    %c0_51 = arith.constant 0 : index
    %c0_52 = arith.constant 0 : index
    %161 = vector.load %arg16[%c0_51, %c0_52] : memref<1x32xf32, #tpu.memory_space<vmem>>, vector<1x32xf32>
    %c0_53 = arith.constant 0 : index
    %c0_54 = arith.constant 0 : index
    %162 = vector.load %arg17[%c0_53, %c0_54] : memref<1x32xf32, #tpu.memory_space<vmem>>, vector<1x32xf32>
    %cst_55 = arith.constant dense<0.000000e+00> : vector<16xf32>
    %163 = vector.multi_reduction <add>, %160, %cst_55 [1] : vector<16x32xf32> to vector<16xf32>
    %164 = vector.shape_cast %163 : vector<16xf32> to vector<16x1xf32>
    %cst_56 = arith.constant 3.200000e+01 : f32
    %165 = vector.broadcast %cst_56 : f32 to vector<16x1xf32>
    %166 = arith.divf %164, %165 : vector<16x1xf32>
    %167 = vector.broadcast %166 : vector<16x1xf32> to vector<16x32xf32>
    %168 = arith.subf %160, %167 : vector<16x32xf32>
    %169 = arith.mulf %168, %168 : vector<16x32xf32>
    %cst_57 = arith.constant dense<0.000000e+00> : vector<16xf32>
    %170 = vector.multi_reduction <add>, %169, %cst_57 [1] : vector<16x32xf32> to vector<16xf32>
    %171 = vector.shape_cast %170 : vector<16xf32> to vector<16x1xf32>
    %cst_58 = arith.constant 3.200000e+01 : f32
    %172 = vector.broadcast %cst_58 : f32 to vector<16x1xf32>
    %173 = arith.divf %171, %172 : vector<16x1xf32>
    %174 = vector.broadcast %166 : vector<16x1xf32> to vector<16x32xf32>
    %175 = arith.subf %160, %174 : vector<16x32xf32>
    %cst_59 = arith.constant 9.99999974E-6 : f32
    %176 = vector.broadcast %cst_59 : f32 to vector<16x1xf32>
    %177 = arith.addf %173, %176 : vector<16x1xf32>
    %178 = math.rsqrt %177 : vector<16x1xf32>
    %179 = vector.broadcast %178 : vector<16x1xf32> to vector<16x32xf32>
    %180 = arith.mulf %175, %179 : vector<16x32xf32>
    %181 = vector.broadcast %161 : vector<1x32xf32> to vector<16x32xf32>
    %182 = arith.mulf %180, %181 : vector<16x32xf32>
    %183 = vector.broadcast %162 : vector<1x32xf32> to vector<16x32xf32>
    %184 = arith.addf %182, %183 : vector<16x32xf32>
    %c0_60 = arith.constant 0 : index
    %c0_61 = arith.constant 0 : index
    %185 = vector.load %arg6[%c0_60, %c0_61] : memref<32x96xbf16, #tpu.memory_space<vmem>>, vector<32x96xbf16>
    %186 = arith.truncf %184 : vector<16x32xf32> to vector<16x32xbf16>
    %187 = vector.extract_strided_slice %185 {offsets = [0, 0], sizes = [32, 32], strides = [1, 1]} : vector<32x96xbf16> to vector<32x32xbf16>
    %cst_62 = arith.constant dense<0.000000e+00> : vector<16x32xf32>
    %188 = tpu.matmul %186, %187, %cst_62 {dimension_numbers = #tpu.dot_dimension_numbers<[1], [0], [0], [1], [0, 0, 1, 1], [], []>} : vector<16x32xbf16>, vector<32x32xbf16>, vector<16x32xf32> -> vector<16x32xf32>
    %c0_63 = arith.constant 0 : index
    %c0_64 = arith.constant 0 : index
    %189 = vector.load %arg7[%c0_63, %c0_64] : memref<1x96xf32, #tpu.memory_space<vmem>>, vector<1x32xf32>
    %190 = vector.broadcast %189 : vector<1x32xf32> to vector<16x32xf32>
    %191 = arith.addf %188, %190 : vector<16x32xf32>
    %192 = arith.truncf %1 : vector<16x32xf32> to vector<16x32xbf16>
    %193 = vector.extract_strided_slice %185 {offsets = [0, 32], sizes = [32, 64], strides = [1, 1]} : vector<32x96xbf16> to vector<32x64xbf16>
    %cst_65 = arith.constant dense<0.000000e+00> : vector<16x64xf32>
    %194 = tpu.matmul %192, %193, %cst_65 {dimension_numbers = #tpu.dot_dimension_numbers<[1], [0], [0], [1], [0, 0, 1, 1], [], []>} : vector<16x32xbf16>, vector<32x64xbf16>, vector<16x64xf32> -> vector<16x64xf32>
    %c0_66 = arith.constant 0 : index
    %c32 = arith.constant 32 : index
    %195 = vector.load %arg7[%c0_66, %c32] : memref<1x96xf32, #tpu.memory_space<vmem>>, vector<1x64xf32>
    %196 = vector.broadcast %195 : vector<1x64xf32> to vector<16x64xf32>
    %197 = arith.addf %194, %196 : vector<16x64xf32>
    %198 = vector.extract_strided_slice %197 {offsets = [0, 0], sizes = [16, 32], strides = [1, 1]} : vector<16x64xf32> to vector<16x32xf32>
    %199 = vector.extract_strided_slice %197 {offsets = [0, 32], sizes = [16, 32], strides = [1, 1]} : vector<16x64xf32> to vector<16x32xf32>
    %c0_67 = arith.constant 0 : index
    %c0_68 = arith.constant 0 : index
    %200 = vector.load %arg8[%c0_67, %c0_68] : memref<32x32xbf16, #tpu.memory_space<vmem>>, vector<32x32xbf16>
    %c0_69 = arith.constant 0 : index
    %c0_70 = arith.constant 0 : index
    %201 = vector.load %arg9[%c0_69, %c0_70] : memref<1x32xf32, #tpu.memory_space<vmem>>, vector<1x32xf32>
    %cst_71 = arith.constant 0.353553385 : f32
    %202 = vector.broadcast %cst_71 : f32 to vector<16x32xf32>
    %203 = arith.mulf %191, %202 : vector<16x32xf32>
    %204 = arith.truncf %203 : vector<16x32xf32> to vector<16x32xbf16>
    %205 = arith.truncf %198 : vector<16x32xf32> to vector<16x32xbf16>
    %206 = arith.truncf %199 : vector<16x32xf32> to vector<16x32xbf16>
    %cst_72 = arith.constant 0.000000e+00 : f32
    %207 = vector.broadcast %cst_72 : f32 to vector<16x32xf32>
    %cst_73 = arith.constant 0.000000e+00 : f32
    %208 = vector.broadcast %cst_73 : f32 to vector<16x16xf32>
    %209 = vector.extract_strided_slice %204 {offsets = [0, 0], sizes = [16, 8], strides = [1, 1]} : vector<16x32xbf16> to vector<16x8xbf16>
    %210 = vector.extract_strided_slice %205 {offsets = [0, 0], sizes = [16, 8], strides = [1, 1]} : vector<16x32xbf16> to vector<16x8xbf16>
    %cst_74 = arith.constant dense<0.000000e+00> : vector<16x16xf32>
    %211 = tpu.matmul %209, %210, %cst_74 {dimension_numbers = #tpu.dot_dimension_numbers<[1], [1], [0], [0], [0, 0, 1, 0], [], []>} : vector<16x8xbf16>, vector<16x8xbf16>, vector<16x16xf32> -> vector<16x16xf32>
    %212 = arith.addf %211, %29 : vector<16x16xf32>
    %cst_75 = arith.constant dense<0xFF800000> : vector<16xf32>
    %213 = vector.multi_reduction <maximumf>, %212, %cst_75 [1] : vector<16x16xf32> to vector<16xf32>
    %214 = vector.shape_cast %213 : vector<16xf32> to vector<16x1xf32>
    %215 = vector.broadcast %214 : vector<16x1xf32> to vector<16x16xf32>
    %216 = arith.subf %212, %215 : vector<16x16xf32>
    %217 = math.exp %216 : vector<16x16xf32>
    %cst_76 = arith.constant dense<0.000000e+00> : vector<16xf32>
    %218 = vector.multi_reduction <add>, %217, %cst_76 [1] : vector<16x16xf32> to vector<16xf32>
    %219 = vector.shape_cast %218 : vector<16xf32> to vector<16x1xf32>
    %220 = vector.broadcast %219 : vector<16x1xf32> to vector<16x16xf32>
    %221 = arith.divf %217, %220 : vector<16x16xf32>
    %222 = arith.addf %208, %221 : vector<16x16xf32>
    %223 = arith.truncf %221 : vector<16x16xf32> to vector<16x16xbf16>
    %224 = vector.extract_strided_slice %206 {offsets = [0, 0], sizes = [16, 8], strides = [1, 1]} : vector<16x32xbf16> to vector<16x8xbf16>
    %cst_77 = arith.constant dense<0.000000e+00> : vector<16x8xf32>
    %225 = tpu.matmul %223, %224, %cst_77 {dimension_numbers = #tpu.dot_dimension_numbers<[1], [0], [0], [1], [0, 0, 1, 1], [], []>} : vector<16x16xbf16>, vector<16x8xbf16>, vector<16x8xf32> -> vector<16x8xf32>
    %226 = arith.truncf %225 : vector<16x8xf32> to vector<16x8xbf16>
    %227 = vector.extract_strided_slice %200 {offsets = [0, 0], sizes = [8, 32], strides = [1, 1]} : vector<32x32xbf16> to vector<8x32xbf16>
    %cst_78 = arith.constant dense<0.000000e+00> : vector<16x32xf32>
    %228 = tpu.matmul %226, %227, %cst_78 {dimension_numbers = #tpu.dot_dimension_numbers<[1], [0], [0], [1], [0, 0, 1, 1], [], []>} : vector<16x8xbf16>, vector<8x32xbf16>, vector<16x32xf32> -> vector<16x32xf32>
    %229 = arith.addf %207, %228 : vector<16x32xf32>
    %230 = vector.extract_strided_slice %204 {offsets = [0, 8], sizes = [16, 8], strides = [1, 1]} : vector<16x32xbf16> to vector<16x8xbf16>
    %231 = vector.extract_strided_slice %205 {offsets = [0, 8], sizes = [16, 8], strides = [1, 1]} : vector<16x32xbf16> to vector<16x8xbf16>
    %cst_79 = arith.constant dense<0.000000e+00> : vector<16x16xf32>
    %232 = tpu.matmul %230, %231, %cst_79 {dimension_numbers = #tpu.dot_dimension_numbers<[1], [1], [0], [0], [0, 0, 1, 0], [], []>} : vector<16x8xbf16>, vector<16x8xbf16>, vector<16x16xf32> -> vector<16x16xf32>
    %233 = arith.addf %232, %29 : vector<16x16xf32>
    %cst_80 = arith.constant dense<0xFF800000> : vector<16xf32>
    %234 = vector.multi_reduction <maximumf>, %233, %cst_80 [1] : vector<16x16xf32> to vector<16xf32>
    %235 = vector.shape_cast %234 : vector<16xf32> to vector<16x1xf32>
    %236 = vector.broadcast %235 : vector<16x1xf32> to vector<16x16xf32>
    %237 = arith.subf %233, %236 : vector<16x16xf32>
    %238 = math.exp %237 : vector<16x16xf32>
    %cst_81 = arith.constant dense<0.000000e+00> : vector<16xf32>
    %239 = vector.multi_reduction <add>, %238, %cst_81 [1] : vector<16x16xf32> to vector<16xf32>
    %240 = vector.shape_cast %239 : vector<16xf32> to vector<16x1xf32>
    %241 = vector.broadcast %240 : vector<16x1xf32> to vector<16x16xf32>
    %242 = arith.divf %238, %241 : vector<16x16xf32>
    %243 = arith.addf %222, %242 : vector<16x16xf32>
    %244 = arith.truncf %242 : vector<16x16xf32> to vector<16x16xbf16>
    %245 = vector.extract_strided_slice %206 {offsets = [0, 8], sizes = [16, 8], strides = [1, 1]} : vector<16x32xbf16> to vector<16x8xbf16>
    %cst_82 = arith.constant dense<0.000000e+00> : vector<16x8xf32>
    %246 = tpu.matmul %244, %245, %cst_82 {dimension_numbers = #tpu.dot_dimension_numbers<[1], [0], [0], [1], [0, 0, 1, 1], [], []>} : vector<16x16xbf16>, vector<16x8xbf16>, vector<16x8xf32> -> vector<16x8xf32>
    %247 = arith.truncf %246 : vector<16x8xf32> to vector<16x8xbf16>
    %248 = vector.extract_strided_slice %200 {offsets = [8, 0], sizes = [8, 32], strides = [1, 1]} : vector<32x32xbf16> to vector<8x32xbf16>
    %cst_83 = arith.constant dense<0.000000e+00> : vector<16x32xf32>
    %249 = tpu.matmul %247, %248, %cst_83 {dimension_numbers = #tpu.dot_dimension_numbers<[1], [0], [0], [1], [0, 0, 1, 1], [], []>} : vector<16x8xbf16>, vector<8x32xbf16>, vector<16x32xf32> -> vector<16x32xf32>
    %250 = arith.addf %229, %249 : vector<16x32xf32>
    %251 = vector.extract_strided_slice %204 {offsets = [0, 16], sizes = [16, 8], strides = [1, 1]} : vector<16x32xbf16> to vector<16x8xbf16>
    %252 = vector.extract_strided_slice %205 {offsets = [0, 16], sizes = [16, 8], strides = [1, 1]} : vector<16x32xbf16> to vector<16x8xbf16>
    %cst_84 = arith.constant dense<0.000000e+00> : vector<16x16xf32>
    %253 = tpu.matmul %251, %252, %cst_84 {dimension_numbers = #tpu.dot_dimension_numbers<[1], [1], [0], [0], [0, 0, 1, 0], [], []>} : vector<16x8xbf16>, vector<16x8xbf16>, vector<16x16xf32> -> vector<16x16xf32>
    %254 = arith.addf %253, %29 : vector<16x16xf32>
    %cst_85 = arith.constant dense<0xFF800000> : vector<16xf32>
    %255 = vector.multi_reduction <maximumf>, %254, %cst_85 [1] : vector<16x16xf32> to vector<16xf32>
    %256 = vector.shape_cast %255 : vector<16xf32> to vector<16x1xf32>
    %257 = vector.broadcast %256 : vector<16x1xf32> to vector<16x16xf32>
    %258 = arith.subf %254, %257 : vector<16x16xf32>
    %259 = math.exp %258 : vector<16x16xf32>
    %cst_86 = arith.constant dense<0.000000e+00> : vector<16xf32>
    %260 = vector.multi_reduction <add>, %259, %cst_86 [1] : vector<16x16xf32> to vector<16xf32>
    %261 = vector.shape_cast %260 : vector<16xf32> to vector<16x1xf32>
    %262 = vector.broadcast %261 : vector<16x1xf32> to vector<16x16xf32>
    %263 = arith.divf %259, %262 : vector<16x16xf32>
    %264 = arith.addf %243, %263 : vector<16x16xf32>
    %265 = arith.truncf %263 : vector<16x16xf32> to vector<16x16xbf16>
    %266 = vector.extract_strided_slice %206 {offsets = [0, 16], sizes = [16, 8], strides = [1, 1]} : vector<16x32xbf16> to vector<16x8xbf16>
    %cst_87 = arith.constant dense<0.000000e+00> : vector<16x8xf32>
    %267 = tpu.matmul %265, %266, %cst_87 {dimension_numbers = #tpu.dot_dimension_numbers<[1], [0], [0], [1], [0, 0, 1, 1], [], []>} : vector<16x16xbf16>, vector<16x8xbf16>, vector<16x8xf32> -> vector<16x8xf32>
    %268 = arith.truncf %267 : vector<16x8xf32> to vector<16x8xbf16>
    %269 = vector.extract_strided_slice %200 {offsets = [16, 0], sizes = [8, 32], strides = [1, 1]} : vector<32x32xbf16> to vector<8x32xbf16>
    %cst_88 = arith.constant dense<0.000000e+00> : vector<16x32xf32>
    %270 = tpu.matmul %268, %269, %cst_88 {dimension_numbers = #tpu.dot_dimension_numbers<[1], [0], [0], [1], [0, 0, 1, 1], [], []>} : vector<16x8xbf16>, vector<8x32xbf16>, vector<16x32xf32> -> vector<16x32xf32>
    %271 = arith.addf %250, %270 : vector<16x32xf32>
    %272 = vector.extract_strided_slice %204 {offsets = [0, 24], sizes = [16, 8], strides = [1, 1]} : vector<16x32xbf16> to vector<16x8xbf16>
    %273 = vector.extract_strided_slice %205 {offsets = [0, 24], sizes = [16, 8], strides = [1, 1]} : vector<16x32xbf16> to vector<16x8xbf16>
    %cst_89 = arith.constant dense<0.000000e+00> : vector<16x16xf32>
    %274 = tpu.matmul %272, %273, %cst_89 {dimension_numbers = #tpu.dot_dimension_numbers<[1], [1], [0], [0], [0, 0, 1, 0], [], []>} : vector<16x8xbf16>, vector<16x8xbf16>, vector<16x16xf32> -> vector<16x16xf32>
    %275 = arith.addf %274, %29 : vector<16x16xf32>
    %cst_90 = arith.constant dense<0xFF800000> : vector<16xf32>
    %276 = vector.multi_reduction <maximumf>, %275, %cst_90 [1] : vector<16x16xf32> to vector<16xf32>
    %277 = vector.shape_cast %276 : vector<16xf32> to vector<16x1xf32>
    %278 = vector.broadcast %277 : vector<16x1xf32> to vector<16x16xf32>
    %279 = arith.subf %275, %278 : vector<16x16xf32>
    %280 = math.exp %279 : vector<16x16xf32>
    %cst_91 = arith.constant dense<0.000000e+00> : vector<16xf32>
    %281 = vector.multi_reduction <add>, %280, %cst_91 [1] : vector<16x16xf32> to vector<16xf32>
    %282 = vector.shape_cast %281 : vector<16xf32> to vector<16x1xf32>
    %283 = vector.broadcast %282 : vector<16x1xf32> to vector<16x16xf32>
    %284 = arith.divf %280, %283 : vector<16x16xf32>
    %285 = arith.addf %264, %284 : vector<16x16xf32>
    %286 = arith.truncf %284 : vector<16x16xf32> to vector<16x16xbf16>
    %287 = vector.extract_strided_slice %206 {offsets = [0, 24], sizes = [16, 8], strides = [1, 1]} : vector<16x32xbf16> to vector<16x8xbf16>
    %cst_92 = arith.constant dense<0.000000e+00> : vector<16x8xf32>
    %288 = tpu.matmul %286, %287, %cst_92 {dimension_numbers = #tpu.dot_dimension_numbers<[1], [0], [0], [1], [0, 0, 1, 1], [], []>} : vector<16x16xbf16>, vector<16x8xbf16>, vector<16x8xf32> -> vector<16x8xf32>
    %289 = arith.truncf %288 : vector<16x8xf32> to vector<16x8xbf16>
    %290 = vector.extract_strided_slice %200 {offsets = [24, 0], sizes = [8, 32], strides = [1, 1]} : vector<32x32xbf16> to vector<8x32xbf16>
    %cst_93 = arith.constant dense<0.000000e+00> : vector<16x32xf32>
    %291 = tpu.matmul %289, %290, %cst_93 {dimension_numbers = #tpu.dot_dimension_numbers<[1], [0], [0], [1], [0, 0, 1, 1], [], []>} : vector<16x8xbf16>, vector<8x32xbf16>, vector<16x32xf32> -> vector<16x32xf32>
    %292 = arith.addf %271, %291 : vector<16x32xf32>
    %293 = vector.broadcast %201 : vector<1x32xf32> to vector<16x32xf32>
    %294 = arith.addf %292, %293 : vector<16x32xf32>
    %cst_94 = arith.constant 2.500000e-01 : f32
    %295 = vector.broadcast %cst_94 : f32 to vector<16x16xf32>
    %296 = arith.mulf %285, %295 : vector<16x16xf32>
    %297 = arith.addf %160, %294 : vector<16x32xf32>
    %c0_95 = arith.constant 0 : index
    %c0_96 = arith.constant 0 : index
    %298 = vector.load %arg18[%c0_95, %c0_96] : memref<1x32xf32, #tpu.memory_space<vmem>>, vector<1x32xf32>
    %c0_97 = arith.constant 0 : index
    %c0_98 = arith.constant 0 : index
    %299 = vector.load %arg19[%c0_97, %c0_98] : memref<1x32xf32, #tpu.memory_space<vmem>>, vector<1x32xf32>
    %cst_99 = arith.constant dense<0.000000e+00> : vector<16xf32>
    %300 = vector.multi_reduction <add>, %297, %cst_99 [1] : vector<16x32xf32> to vector<16xf32>
    %301 = vector.shape_cast %300 : vector<16xf32> to vector<16x1xf32>
    %cst_100 = arith.constant 3.200000e+01 : f32
    %302 = vector.broadcast %cst_100 : f32 to vector<16x1xf32>
    %303 = arith.divf %301, %302 : vector<16x1xf32>
    %304 = vector.broadcast %303 : vector<16x1xf32> to vector<16x32xf32>
    %305 = arith.subf %297, %304 : vector<16x32xf32>
    %306 = arith.mulf %305, %305 : vector<16x32xf32>
    %cst_101 = arith.constant dense<0.000000e+00> : vector<16xf32>
    %307 = vector.multi_reduction <add>, %306, %cst_101 [1] : vector<16x32xf32> to vector<16xf32>
    %308 = vector.shape_cast %307 : vector<16xf32> to vector<16x1xf32>
    %cst_102 = arith.constant 3.200000e+01 : f32
    %309 = vector.broadcast %cst_102 : f32 to vector<16x1xf32>
    %310 = arith.divf %308, %309 : vector<16x1xf32>
    %311 = vector.broadcast %303 : vector<16x1xf32> to vector<16x32xf32>
    %312 = arith.subf %297, %311 : vector<16x32xf32>
    %cst_103 = arith.constant 9.99999974E-6 : f32
    %313 = vector.broadcast %cst_103 : f32 to vector<16x1xf32>
    %314 = arith.addf %310, %313 : vector<16x1xf32>
    %315 = math.rsqrt %314 : vector<16x1xf32>
    %316 = vector.broadcast %315 : vector<16x1xf32> to vector<16x32xf32>
    %317 = arith.mulf %312, %316 : vector<16x32xf32>
    %318 = vector.broadcast %298 : vector<1x32xf32> to vector<16x32xf32>
    %319 = arith.mulf %317, %318 : vector<16x32xf32>
    %320 = vector.broadcast %299 : vector<1x32xf32> to vector<16x32xf32>
    %321 = arith.addf %319, %320 : vector<16x32xf32>
    %322 = arith.truncf %321 : vector<16x32xf32> to vector<16x32xbf16>
    %c0_104 = arith.constant 0 : index
    %c0_105 = arith.constant 0 : index
    %323 = vector.load %arg10[%c0_104, %c0_105] : memref<32x64xbf16, #tpu.memory_space<vmem>>, vector<32x64xbf16>
    %cst_106 = arith.constant dense<0.000000e+00> : vector<16x64xf32>
    %324 = tpu.matmul %322, %323, %cst_106 {dimension_numbers = #tpu.dot_dimension_numbers<[1], [0], [0], [1], [0, 0, 1, 1], [], []>} : vector<16x32xbf16>, vector<32x64xbf16>, vector<16x64xf32> -> vector<16x64xf32>
    %c0_107 = arith.constant 0 : index
    %c0_108 = arith.constant 0 : index
    %325 = vector.load %arg11[%c0_107, %c0_108] : memref<1x64xf32, #tpu.memory_space<vmem>>, vector<1x64xf32>
    %326 = vector.broadcast %325 : vector<1x64xf32> to vector<16x64xf32>
    %327 = arith.addf %324, %326 : vector<16x64xf32>
    %cst_109 = arith.constant 0.000000e+00 : f32
    %328 = vector.broadcast %cst_109 : f32 to vector<16x64xf32>
    %329 = arith.maximumf %327, %328 : vector<16x64xf32>
    %330 = arith.truncf %329 : vector<16x64xf32> to vector<16x64xbf16>
    %c0_110 = arith.constant 0 : index
    %c0_111 = arith.constant 0 : index
    %331 = vector.load %arg12[%c0_110, %c0_111] : memref<64x32xbf16, #tpu.memory_space<vmem>>, vector<64x32xbf16>
    %cst_112 = arith.constant dense<0.000000e+00> : vector<16x32xf32>
    %332 = tpu.matmul %330, %331, %cst_112 {dimension_numbers = #tpu.dot_dimension_numbers<[1], [0], [0], [1], [0, 0, 1, 1], [], []>} : vector<16x64xbf16>, vector<64x32xbf16>, vector<16x32xf32> -> vector<16x32xf32>
    %c0_113 = arith.constant 0 : index
    %c0_114 = arith.constant 0 : index
    %333 = vector.load %arg13[%c0_113, %c0_114] : memref<1x32xf32, #tpu.memory_space<vmem>>, vector<1x32xf32>
    %334 = vector.broadcast %333 : vector<1x32xf32> to vector<16x32xf32>
    %335 = arith.addf %332, %334 : vector<16x32xf32>
    %336 = arith.addf %297, %335 : vector<16x32xf32>
    %c0_115 = arith.constant 0 : index
    %c0_116 = arith.constant 0 : index
    %337 = vector.load %arg20[%c0_115, %c0_116] : memref<16x32xf32, #tpu.memory_space<vmem>>, vector<16x32xf32>
    tpu.vector_store %arg20[%c0_115, %c0_116], %336 {strides = array<i32>} : memref<16x32xf32, #tpu.memory_space<vmem>>, vector<16x32xf32>,
    %338 = vector.extract_strided_slice %159 {offsets = [0, 0], sizes = [8, 8], strides = [1, 1]} : vector<16x16xf32> to vector<8x8xf32>
    %339 = vector.extract_strided_slice %296 {offsets = [0, 0], sizes = [8, 8], strides = [1, 1]} : vector<16x16xf32> to vector<8x8xf32>
    %340 = tpu.concatenate %338, %339 in 1 : vector<8x8xf32>, vector<8x8xf32> -> vector<8x16xf32>
    %c0_117 = arith.constant 0 : index
    %c0_118 = arith.constant 0 : index
    %341 = vector.load %arg21[%c0_117, %c0_118] : memref<16x16xf32, #tpu.memory_space<vmem>>, vector<8x16xf32>
    tpu.vector_store %arg21[%c0_117, %c0_118], %340 {strides = array<i32>} : memref<16x16xf32, #tpu.memory_space<vmem>>, vector<8x16xf32>,
    %342 = vector.extract_strided_slice %159 {offsets = [8, 8], sizes = [8, 8], strides = [1, 1]} : vector<16x16xf32> to vector<8x8xf32>
    %343 = vector.extract_strided_slice %296 {offsets = [8, 8], sizes = [8, 8], strides = [1, 1]} : vector<16x16xf32> to vector<8x8xf32>
    %344 = tpu.concatenate %342, %343 in 1 : vector<8x8xf32>, vector<8x8xf32> -> vector<8x16xf32>
    %c8 = arith.constant 8 : index
    %c0_119 = arith.constant 0 : index
    %345 = vector.load %arg21[%c8, %c0_119] : memref<16x16xf32, #tpu.memory_space<vmem>>, vector<8x16xf32>
    tpu.vector_store %arg21[%c8, %c0_119], %344 {strides = array<i32>} : memref<16x16xf32, #tpu.memory_space<vmem>>, vector<8x16xf32>,
    return
  }
}

</mosaic_0001>

<llo_original>
// kernel: tpu_custom_call.1
$region0: #{tpu_custom_call.1}
  #allocation0 [shape = 'u32[]', space=smem, size = 0x4, offset = 0x4, fixed_abs, tag = 'smem constant byte address 0x4 - core index']
  #allocation1 [shape = 'u32[72,128]{1,0:T(1,128)}', space=vmem, size = 0x9000, scoped, tag = 'internal scratch']
  %s0 = inlined_call_operand.vmem [shape: f32[16,32], index: 0, kind: input, shape index: {}]
  %s1 = inlined_call_operand.vmem [shape: f32[16,32], index: 1, kind: input, shape index: {}]
  %s2 = inlined_call_operand.vmem [shape: bf16[32,96], index: 2, kind: input, shape index: {}]
  %s3 = inlined_call_operand.vmem [shape: f32[1,96], index: 3, kind: input, shape index: {}]
  %s4 = inlined_call_operand.hbm [shape: bf16[32,32], index: 4, kind: input, shape index: {}]
  %s5 = inlined_call_operand.vmem [shape: f32[1,32], index: 5, kind: input, shape index: {}]
  %s6 = inlined_call_operand.hbm [shape: bf16[32,96], index: 6, kind: input, shape index: {}]
  %s7 = inlined_call_operand.vmem [shape: f32[1,96], index: 7, kind: input, shape index: {}]
  %s8 = inlined_call_operand.hbm [shape: bf16[32,32], index: 8, kind: input, shape index: {}]
  %s9 = inlined_call_operand.vmem [shape: f32[1,32], index: 9, kind: input, shape index: {}]
  %s10 = inlined_call_operand.hbm [shape: bf16[32,64], index: 10, kind: input, shape index: {}]
  %s11 = inlined_call_operand.vmem [shape: f32[1,64], index: 11, kind: input, shape index: {}]
  %s12 = inlined_call_operand.vmem [shape: bf16[64,32], index: 12, kind: input, shape index: {}]
  %s13 = inlined_call_operand.vmem [shape: f32[1,32], index: 13, kind: input, shape index: {}]
  %s14 = inlined_call_operand.vmem [shape: f32[1,32], index: 14, kind: input, shape index: {}]
  %s15 = inlined_call_operand.vmem [shape: f32[1,32], index: 15, kind: input, shape index: {}]
  %s16 = inlined_call_operand.vmem [shape: f32[1,32], index: 16, kind: input, shape index: {}]
  %s17 = inlined_call_operand.vmem [shape: f32[1,32], index: 17, kind: input, shape index: {}]
  %s18 = inlined_call_operand.vmem [shape: f32[1,32], index: 18, kind: input, shape index: {}]
  %s19 = inlined_call_operand.vmem [shape: f32[1,32], index: 19, kind: input, shape index: {}]
  %s20 = inlined_call_operand.hbm [shape: f32[16,32], index: 20, kind: output, shape index: {0}]
  %s21 = inlined_call_operand.hbm [shape: f32[16,16], index: 21, kind: output, shape index: {1}]
  %22 = xla_tuple %s20, %s21
  %s23 = sld [smem:[#allocation0]]
  $region114: #{tpu_custom_call.1} parent=0
    _
  %s25 = ssub.s32 1, %s23
  %s26 = scalar_select 0, %s25, %s23
  $region1: #{tpu_custom_call.1} parent=0
    #allocation2 [shape = 'u8[8192]{0}', space=vmem, size = 0x2000, scoped, tag = 'input window, operand 4, single buffered']
    #allocation3 [shape = 's32[1]{0}', space=sflag, size = 0x4, scoped, tag = 'scoped memory for tpu_custom_call.1']
    #allocation4 [shape = 's32[1]{0}', space=sflag, size = 0x4, scoped, tag = 'scoped memory for tpu_custom_call.1']
    #allocation5 [shape = 'u8[8192]{0}', space=vmem, size = 0x2000, scoped, tag = 'input window, operand 6, single buffered']
    #allocation6 [shape = 's32[1]{0}', space=sflag, size = 0x4, scoped, tag = 'scoped memory for tpu_custom_call.1']
    #allocation7 [shape = 'u8[8192]{0}', space=vmem, size = 0x2000, scoped, tag = 'input window, operand 8, single buffered']
    #allocation8 [shape = 'u8[8192]{0}', space=vmem, size = 0x2000, scoped, tag = 'input window, operand 10, single buffered']
    #allocation9 [shape = 's32[1]{0}', space=sflag, size = 0x4, scoped, tag = 'scoped memory for tpu_custom_call.1']
    #allocation10 [shape = 'u8[8192]{0}', space=vmem, size = 0x2000, scoped, tag = 'output window, operand 0, single buffered']
    #allocation11 [shape = 'u8[8192]{0}', space=vmem, size = 0x2000, scoped, tag = 'output window, operand 1, single buffered']
    #allocation12 [shape = 's32[1]{0}', space=sflag, size = 0x4, scoped, tag = 'scoped memory for tpu_custom_call.1']
    %27 = vsyncpa [#allocation3], 0
    %28 = vsyncpa [#allocation6], 0
    %29 = vsyncpa [#allocation9], 0
    %30 = vsyncpa [#allocation4], 0
    %31 = vsyncpa [#allocation12], 0
    // Predicated region
    $region2: #{tpu_custom_call.1} parent=1 // pred_check
      _
    $region3: #{tpu_custom_call.1} parent=1 // pred_check_branch
      %33 = sbr.rel (0) target = $region5
    $region4: #{tpu_custom_call.1} parent=1 // pred_region
      _
    $region5: #{tpu_custom_call.1} parent=1 // pred_fallthru
      _
    // Predicated region
    $region6: #{tpu_custom_call.1} parent=1 // pred_check
      _
    $region7: #{tpu_custom_call.1} parent=1 // pred_check_branch
      %35 = sbr.rel (0) target = $region9
    $region8: #{tpu_custom_call.1} parent=1 // pred_region
      _
    $region9: #{tpu_custom_call.1} parent=1 // pred_fallthru
      _
    // Predicated region
    $region10: #{tpu_custom_call.1} parent=1 // pred_check
      _
    $region11: #{tpu_custom_call.1} parent=1 // pred_check_branch
      %37 = sbr.rel (0) target = $region13
    $region12: #{tpu_custom_call.1} parent=1 // pred_region
      _
    $region13: #{tpu_custom_call.1} parent=1 // pred_fallthru
      _
    // Predicated region
    $region14: #{tpu_custom_call.1} parent=1 // pred_check
      _
    $region15: #{tpu_custom_call.1} parent=1 // pred_check_branch
      %39 = sbr.rel (0) target = $region17
    $region16: #{tpu_custom_call.1} parent=1 // pred_region
      _
    $region17: #{tpu_custom_call.1} parent=1 // pred_fallthru
      _
    // Predicated region
    $region18: #{tpu_custom_call.1} parent=1 // pred_check
      _
    $region19: #{tpu_custom_call.1} parent=1 // pred_check_branch
      %41 = sbr.rel (0) target = $region21
    $region20: #{tpu_custom_call.1} parent=1 // pred_region
      %43 = vsyncadd [#allocation3], 0
      %s44 = sshll.u32 %s4, 4
      %s45 = int_to_ptr.hbm [resolvable:$true] %s44
      %s46 = sshll.u32 [#allocation2], 4
      %s47 = int_to_ptr.vmem [resolvable:$true] %s46
      %52 = dma.hbm_to_vmem [thread:$0]  %s45, 256, %s47, [#allocation3], 64, 64, 4
    $region21: #{tpu_custom_call.1} parent=1 // pred_fallthru
      _
    // Predicated region
    $region22: #{tpu_custom_call.1} parent=1 // pred_check
      _
    $region23: #{tpu_custom_call.1} parent=1 // pred_check_branch
      %54 = sbr.rel (0) target = $region25
    $region24: #{tpu_custom_call.1} parent=1 // pred_region
      _
    $region25: #{tpu_custom_call.1} parent=1 // pred_fallthru
      _
    // Predicated region
    $region26: #{tpu_custom_call.1} parent=1 // pred_check
      _
    $region27: #{tpu_custom_call.1} parent=1 // pred_check_branch
      %56 = sbr.rel (0) target = $region29
    $region28: #{tpu_custom_call.1} parent=1 // pred_region
      %58 = vsyncadd [#allocation6], 0
      %s59 = sshll.u32 %s6, 4
      %s60 = int_to_ptr.hbm [resolvable:$true] %s59
      %s61 = sshll.u32 [#allocation5], 4
      %s62 = int_to_ptr.vmem [resolvable:$true] %s61
      %67 = dma.hbm_to_vmem [thread:$0]  %s60, 256, %s62, [#allocation6], 64, 64, 4
    $region29: #{tpu_custom_call.1} parent=1 // pred_fallthru
      _
    // Predicated region
    $region30: #{tpu_custom_call.1} parent=1 // pred_check
      _
    $region31: #{tpu_custom_call.1} parent=1 // pred_check_branch
      %69 = sbr.rel (0) target = $region33
    $region32: #{tpu_custom_call.1} parent=1 // pred_region
      _
    $region33: #{tpu_custom_call.1} parent=1 // pred_fallthru
      _
    // Predicated region
    $region34: #{tpu_custom_call.1} parent=1 // pred_check
      _
    $region35: #{tpu_custom_call.1} parent=1 // pred_check_branch
      %71 = sbr.rel (0) target = $region37
    $region36: #{tpu_custom_call.1} parent=1 // pred_region
      %73 = vsyncadd [#allocation6], 0
      %s74 = sshll.u32 %s8, 4
      %s75 = int_to_ptr.hbm [resolvable:$true] %s74
      %s76 = sshll.u32 [#allocation7], 4
      %s77 = int_to_ptr.vmem [resolvable:$true] %s76
      %82 = dma.hbm_to_vmem [thread:$0]  %s75, 256, %s77, [#allocation6], 64, 64, 4
    $region37: #{tpu_custom_call.1} parent=1 // pred_fallthru
      _
    // Predicated region
    $region38: #{tpu_custom_call.1} parent=1 // pred_check
      _
    $region39: #{tpu_custom_call.1} parent=1 // pred_check_branch
      %84 = sbr.rel (0) target = $region41
    $region40: #{tpu_custom_call.1} parent=1 // pred_region
      _
    $region41: #{tpu_custom_call.1} parent=1 // pred_fallthru
      _
    // Predicated region
    $region42: #{tpu_custom_call.1} parent=1 // pred_check
      _
    $region43: #{tpu_custom_call.1} parent=1 // pred_check_branch
      %86 = sbr.rel (0) target = $region45
    $region44: #{tpu_custom_call.1} parent=1 // pred_region
      %88 = vsyncadd [#allocation9], 0
      %s89 = sshll.u32 %s10, 4
      %s90 = int_to_ptr.hbm [resolvable:$true] %s89
      %s91 = sshll.u32 [#allocation8], 4
      %s92 = int_to_ptr.vmem [resolvable:$true] %s91
      %97 = dma.hbm_to_vmem [thread:$0]  %s90, 256, %s92, [#allocation9], 64, 64, 4
    $region45: #{tpu_custom_call.1} parent=1 // pred_fallthru
      _
    // Predicated region
    $region46: #{tpu_custom_call.1} parent=1 // pred_check
      _
    $region47: #{tpu_custom_call.1} parent=1 // pred_check_branch
      %99 = sbr.rel (0) target = $region49
    $region48: #{tpu_custom_call.1} parent=1 // pred_region
      _
    $region49: #{tpu_custom_call.1} parent=1 // pred_fallthru
      _
    // Predicated region
    $region50: #{tpu_custom_call.1} parent=1 // pred_check
      _
    $region51: #{tpu_custom_call.1} parent=1 // pred_check_branch
      %101 = sbr.rel (0) target = $region53
    $region52: #{tpu_custom_call.1} parent=1 // pred_region
      _
    $region53: #{tpu_custom_call.1} parent=1 // pred_fallthru
      _
    // Predicated region
    $region54: #{tpu_custom_call.1} parent=1 // pred_check
      _
    $region55: #{tpu_custom_call.1} parent=1 // pred_check_branch
      %103 = sbr.rel (0) target = $region57
    $region56: #{tpu_custom_call.1} parent=1 // pred_region
      _
    $region57: #{tpu_custom_call.1} parent=1 // pred_fallthru
      _
    // Predicated region
    $region58: #{tpu_custom_call.1} parent=1 // pred_check
      _
    $region59: #{tpu_custom_call.1} parent=1 // pred_check_branch
      %105 = sbr.rel (0) target = $region61
    $region60: #{tpu_custom_call.1} parent=1 // pred_region
      _
    $region61: #{tpu_custom_call.1} parent=1 // pred_fallthru
      _
    // Predicated region
    $region62: #{tpu_custom_call.1} parent=1 // pred_check
      _
    $region63: #{tpu_custom_call.1} parent=1 // pred_check_branch
      %107 = sbr.rel (0) target = $region65
    $region64: #{tpu_custom_call.1} parent=1 // pred_region
      _
    $region65: #{tpu_custom_call.1} parent=1 // pred_fallthru
      _
    // Predicated region
    $region66: #{tpu_custom_call.1} parent=1 // pred_check
      _
    $region67: #{tpu_custom_call.1} parent=1 // pred_check_branch
      %109 = sbr.rel (0) target = $region69
    $region68: #{tpu_custom_call.1} parent=1 // pred_region
      _
    $region69: #{tpu_custom_call.1} parent=1 // pred_fallthru
      _
    // Predicated region
    $region70: #{tpu_custom_call.1} parent=1 // pred_check
      _
    $region71: #{tpu_custom_call.1} parent=1 // pred_check_branch
      %111 = sbr.rel (0) target = $region73
    $region72: #{tpu_custom_call.1} parent=1 // pred_region
      _
    $region73: #{tpu_custom_call.1} parent=1 // pred_fallthru
      _
    // Predicated region
    $region74: #{tpu_custom_call.1} parent=1 // pred_check
      _
    $region75: #{tpu_custom_call.1} parent=1 // pred_check_branch
      %113 = sbr.rel (0) target = $region77
    $region76: #{tpu_custom_call.1} parent=1 // pred_region
      _
    $region77: #{tpu_custom_call.1} parent=1 // pred_fallthru
      _
    // Predicated region
    $region78: #{tpu_custom_call.1} parent=1 // pred_check
      _
    $region79: #{tpu_custom_call.1} parent=1 // pred_check_branch
      %115 = sbr.rel (0) target = $region81
    $region80: #{tpu_custom_call.1} parent=1 // pred_region
      _
    $region81: #{tpu_custom_call.1} parent=1 // pred_fallthru
      _
    // Predicated region
    $region82: #{tpu_custom_call.1} parent=1 // pred_check
      _
    $region83: #{tpu_custom_call.1} parent=1 // pred_check_branch
      %117 = sbr.rel (0) target = $region85
    $region84: #{tpu_custom_call.1} parent=1 // pred_region
      %119 = dma.done [#allocation3], 256
    $region85: #{tpu_custom_call.1} parent=1 // pred_fallthru
      _
    // Predicated region
    $region86: #{tpu_custom_call.1} parent=1 // pred_check
      _
    $region87: #{tpu_custom_call.1} parent=1 // pred_check_branch
      %121 = sbr.rel (0) target = $region89
    $region88: #{tpu_custom_call.1} parent=1 // pred_region
      %123 = dma.done [#allocation6], 256
    $region89: #{tpu_custom_call.1} parent=1 // pred_fallthru
      _
    // Predicated region
    $region90: #{tpu_custom_call.1} parent=1 // pred_check
      _
    $region91: #{tpu_custom_call.1} parent=1 // pred_check_branch
      %125 = sbr.rel (0) target = $region93
    $region92: #{tpu_custom_call.1} parent=1 // pred_region
      %127 = dma.done [#allocation6], 256
    $region93: #{tpu_custom_call.1} parent=1 // pred_fallthru
      _
    // Predicated region
    $region94: #{tpu_custom_call.1} parent=1 // pred_check
      _
    $region95: #{tpu_custom_call.1} parent=1 // pred_check_branch
      %129 = sbr.rel (0) target = $region97
    $region96: #{tpu_custom_call.1} parent=1 // pred_region
      %131 = dma.done [#allocation9], 256
    $region97: #{tpu_custom_call.1} parent=1 // pred_fallthru
      _
    %v133 = vld [vmem:[%s0] sm:$0xff]
    %v134 = vld [vmem:[%s0 + $0x8] sm:$0xff]
    %v135 = vld [vmem:[%s1] sm:$0xff]
    %v136 = vld [vmem:[%s1 + $0x8] sm:$0xff]
    %v137 = vlaneseq
    %v138 = vshrl.u32 %v137, 7
    %v139 = vadd.s32 %v138, 8
    %v140 = vlaneseq
    %v141 = vand.u32 %v140, 127
    %vm142 = vcmp.ge.s32.totalorder %v138, 0
    %vm143 = vcmp.ge.s32.totalorder %v139, 0
    %vm144 = vcmp.lt.s32.totalorder %v138, 8
    %vm145 = vcmp.lt.s32.totalorder %v139, 8
    %vm146 = vmand %vm142, %vm144
    %vm147 = vmand %vm143, %vm145
    %vm148 = vcmp.ge.s32.totalorder %v141, 0
    %vm149 = vcmp.lt.s32.totalorder %v141, 8
    %vm150 = vmand %vm148, %vm149
    %vm151 = vmand %vm146, %vm150
    %vm152 = vmand %vm147, %vm150
    %vm153 = vcmp.ge.s32.totalorder %v138, 8
    %vm154 = vcmp.ge.s32.totalorder %v139, 8
    %vm155 = vcmp.lt.s32.totalorder %v138, 16
    %vm156 = vcmp.lt.s32.totalorder %v139, 16
    %vm157 = vmand %vm153, %vm155
    %vm158 = vmand %vm154, %vm156
    %vm159 = vcmp.ge.s32.totalorder %v141, 8
    %vm160 = vcmp.lt.s32.totalorder %v141, 16
    %vm161 = vmand %vm159, %vm160
    %vm162 = vmand %vm157, %vm161
    %vm163 = vmand %vm158, %vm161
    %vm164 = vmor %vm151, %vm162
    %vm165 = vmor %vm152, %vm163
    %v166 = vsel %vm164, 0.0, -1e+30
    %v167 = vsel %vm165, 0.0, -1e+30
    %v168 = vld [vmem:[%s14] sm:$0x1]
    %v169 = vld [vmem:[%s15] sm:$0x1]
    %vm170 = vcmask 261120
    %v171 = vsel %vm170, %v133, 0.0
    %172 = vadd.xlane.f32.xlu0 %v171
    %v173 = vpop.xlane.xlu0 %172
    %v174 = vsel %vm170, %v134, 0.0
    %175 = vadd.xlane.f32.xlu0 %v174
    %v176 = vpop.xlane.xlu0 %175
    %v177 = vrcp.pop 32.0
    %v178 = vmul.f32 32.0, %v177
    %v179 = vsub.f32 1.0, %v178
    %v180 = vmul.f32 %v177, %v179
    %v181 = vadd.f32 %v177, %v180
    %vm182 = vweird.f32 %v177
    %v183 = vsel %vm182, %v177, %v181
    %v184 = vmul.f32 %v173, %v183
    %v185 = vmul.f32 %v176, %v183
    %v186 = vsub.f32 %v133, %v184
    %v187 = vsub.f32 %v134, %v185
    %v188 = vmul.f32 %v186, %v186
    %v189 = vmul.f32 %v187, %v187
    %v190 = vsel %vm170, %v188, 0.0
    %191 = vadd.xlane.f32.xlu0 %v190
    %v192 = vpop.xlane.xlu0 %191
    %v193 = vsel %vm170, %v189, 0.0
    %194 = vadd.xlane.f32.xlu0 %v193
    %v195 = vpop.xlane.xlu0 %194
    %v196 = vmul.f32 %v192, %v183
    %v197 = vmul.f32 %v195, %v183
    %v198 = vadd.f32 %v196, 1e-05
    %v199 = vadd.f32 %v197, 1e-05
    %v200 = vrsqrt.pop %v198
    %v201 = vmul.f32 %v200, %v198
    %v202 = vmul.f32 %v201, %v200
    %v203 = vmul.f32 0.5, %v202
    %v204 = vsub.f32 1.5, %v203
    %v205 = vmul.f32 %v200, %v204
    %vm206 = vweird.f32 %v198
    %vm207 = vweird.f32 %v200
    %vm208 = vmor %vm206, %vm207
    %v209 = vsel %vm208, %v200, %v205
    %v210 = vrsqrt.pop %v199
    %v211 = vmul.f32 %v210, %v199
    %v212 = vmul.f32 %v211, %v210
    %v213 = vmul.f32 0.5, %v212
    %v214 = vsub.f32 1.5, %v213
    %v215 = vmul.f32 %v210, %v214
    %vm216 = vweird.f32 %v199
    %vm217 = vweird.f32 %v210
    %vm218 = vmor %vm216, %vm217
    %v219 = vsel %vm218, %v210, %v215
    %v220 = vmul.f32 %v186, %v209
    %v221 = vmul.f32 %v187, %v219
    %v223 = vperm.slane %v168, 0
    %v225 = vmul.f32 %v220, %v223
    %v226 = vmul.f32 %v221, %v223
    %v228 = vperm.slane %v169, 0
    %v230 = vadd.f32 %v225, %v228
    %v231 = vadd.f32 %v226, %v228
    %v232 = vpack.c.bf16 %v231, %v230
    %v233 = vld [vmem:[%s2] sm:$0xf]
    %v234 = vld [vmem:[%s2 + $0x4] sm:$0xf]
    %v235 = vld [vmem:[%s2 + $0x8] sm:$0xf]
    %v236 = vld [vmem:[%s2 + $0xc] sm:$0xf]
    %v237 = vld [vmem:[%s3] sm:$0x1]
    %v239 = vperm.slane %v237, 0
    %v245 = vunpack.c.l.b16 %v233
    %v246 = vunpack.c.l.b16 %v234
    %v247 = vunpack.c.l.b16 %v235
    %v248 = vunpack.c.l.b16 %v236
    %v249 = vpack.c.b16 %v246, %v245
    %v250 = vpack.c.b16 %v248, %v247
    %v254 = vsel %vm170, %v232, 0
    %256 = vmatpush.bf16.msra.mxu0 0
    %257 = vmatpush.bf16.msra.mxu0 0
    %258 = vmatpush.bf16.msra.mxu0 0
    %259 = vmatpush.bf16.msra.mxu0 0
    %260 = vmatpush.bf16.msra.mxu0 0
    %261 = vmatpush.bf16.msra.mxu0 0
    %262 = vmatpush.bf16.msra.mxu0 %v250
    %263 = vmatpush.bf16.msra.mxu0 %v249
    %264 = vmatmul.bf16.gmra.mxu0 %v254
    %v265 = vpop.f32.mrf.mxu0
    %v266 = vadd.f32 %v239, %v265
    %v267 = vpop.f32.mrf.mxu0
    %v268 = vadd.f32 %v239, %v267
    %269 = vdwg.mxu0
    %v270 = vld [vmem:[#allocation2] sm:$0xf]
    %v271 = vld [vmem:[#allocation2 + $0x4] sm:$0xf]
    %v272 = vld [vmem:[#allocation2 + $0x8] sm:$0xf]
    %v273 = vld [vmem:[#allocation2 + $0xc] sm:$0xf]
    %v274 = vld [vmem:[%s5] sm:$0x1]
    %v275 = vmul.f32 %v266, 0.35355338
    %v276 = vmul.f32 %v268, 0.35355338
    %v277 = vpack.c.bf16 %v275, %v275
    %v278 = vpack.c.bf16 %v276, %v276
    %v279 = vpack.c.bf16 %v266, %v266
    %v280 = vpack.c.bf16 %v268, %v268
    %v283 = vunpack.c.l.b16 %v277
    %v284 = vunpack.c.l.b16 %v278
    %v285 = vpack.c.b16 %v284, %v283
    %v288 = vunpack.c.l.b16 %v279
    %v289 = vunpack.c.l.b16 %v280
    %v290 = vpack.c.b16 %v289, %v288
    %291 = vrot.lane.b32.xlu0 %v290, 96
    %v292 = vpop.permute.xlu0 %291
    %vm293 = vcmask 64512
    %v295 = vsel %vm293, %v285, 0
    %v298 = vsel %vm293, %v292, 0
    %300 = vmatpush.bf16.xpose.msra.mxu0 0
    %301 = vmatpush.bf16.xpose.msra.mxu0 0
    %302 = vmatpush.bf16.xpose.msra.mxu0 0
    %303 = vmatpush.bf16.xpose.msra.mxu0 0
    %304 = vmatpush.bf16.xpose.msra.mxu0 0
    %305 = vmatpush.bf16.xpose.msra.mxu0 0
    %306 = vmatpush.bf16.xpose.msra.mxu0 0
    %307 = vmatpush.bf16.xpose.msra.mxu0 %v298
    %308 = vmatmul.bf16.gmra.mxu0 %v295
    %v309 = vpop.f32.mrf.mxu0
    %v310 = vadd.f32 %v166, %v309
    %v311 = vpop.f32.mrf.mxu0
    %v312 = vadd.f32 %v167, %v311
    %313 = vdwg.mxu0
    %vm314 = vcmask 130048
    %v315 = vsel %vm314, %v310, -inf
    %316 = vmax.xlane.f32.xlu0 %v315
    %v317 = vpop.xlane.xlu0 %316
    %v318 = vsel %vm314, %v312, -inf
    %319 = vmax.xlane.f32.xlu0 %v318
    %v320 = vpop.xlane.xlu0 %319
    %v321 = vsub.f32 %v310, %v317
    %v322 = vsub.f32 %v312, %v320
    %v323 = vmul.f32 %v321, 1.442695
    %v324 = vpow.pop %v323
    %v325 = vmul.f32 %v322, 1.442695
    %v326 = vpow.pop %v325
    %v327 = vsel %vm314, %v324, 0.0
    %328 = vadd.xlane.f32.xlu0 %v327
    %v329 = vpop.xlane.xlu0 %328
    %v330 = vsel %vm314, %v326, 0.0
    %331 = vadd.xlane.f32.xlu0 %v330
    %v332 = vpop.xlane.xlu0 %331
    %v333 = vrcp.pop %v329
    %v334 = vmul.f32 %v329, %v333
    %v335 = vsub.f32 1.0, %v334
    %v336 = vmul.f32 %v333, %v335
    %v337 = vadd.f32 %v333, %v336
    %vm338 = vweird.f32 %v329
    %vm339 = vweird.f32 %v333
    %vm340 = vmor %vm338, %vm339
    %v341 = vsel %vm340, %v333, %v337
    %v342 = vand.u32 2147483647, %v329
    %vm343 = vcmp.eq.f32.partialorder %v342, 8.507059e+37
    %v344 = vand.u32 %v329, 2147483648
    %v345 = vor.u32 1.1754944e-38, %v344
    %v346 = vsel %vm343, %v345, %v341
    %v347 = vmul.f32 %v324, %v346
    %v348 = vrcp.pop %v332
    %v349 = vmul.f32 %v332, %v348
    %v350 = vsub.f32 1.0, %v349
    %v351 = vmul.f32 %v348, %v350
    %v352 = vadd.f32 %v348, %v351
    %vm353 = vweird.f32 %v332
    %vm354 = vweird.f32 %v348
    %vm355 = vmor %vm353, %vm354
    %v356 = vsel %vm355, %v348, %v352
    %v357 = vand.u32 2147483647, %v332
    %vm358 = vcmp.eq.f32.partialorder %v357, 8.507059e+37
    %v359 = vand.u32 %v332, 2147483648
    %v360 = vor.u32 1.1754944e-38, %v359
    %v361 = vsel %vm358, %v360, %v356
    %v362 = vmul.f32 %v326, %v361
    %v363 = vadd.f32 %v347, 0.0
    %v364 = vadd.f32 %v362, 0.0
    %v365 = vpack.c.bf16 %v362, %v347
    %366 = vrot.lane.b32.xlu0 %v290, 64
    %v367 = vpop.permute.xlu0 %366
    %v370 = vsel %vm314, %v365, 0
    %372 = vmatpush.bf16.msra.mxu0 0
    %373 = vmatpush.bf16.msra.mxu0 0
    %374 = vmatpush.bf16.msra.mxu0 0
    %375 = vmatpush.bf16.msra.mxu0 0
    %376 = vmatpush.bf16.msra.mxu0 0
    %377 = vmatpush.bf16.msra.mxu0 0
    %378 = vmatpush.bf16.msra.mxu0 0
    %379 = vmatpush.bf16.msra.mxu0 %v367
    %380 = vmatmul.bf16.gmra.mxu0 %v370
    %v381 = vpop.f32.mrf.mxu0
    %v382 = vadd.f32 0.0, %v381
    %v383 = vpop.f32.mrf.mxu0
    %v384 = vadd.f32 0.0, %v383
    %385 = vdwg.mxu0
    %v386 = vpack.c.bf16 %v384, %v382
    %387 = vrot.lane.b32.xlu0 %v285, 120
    %v388 = vpop.permute.xlu0 %387
    %389 = vrot.lane.b32.xlu0 %v290, 88
    %v390 = vpop.permute.xlu0 %389
    %v392 = vsel %vm293, %v388, 0
    %v395 = vsel %vm293, %v390, 0
    %397 = vmatpush.bf16.xpose.msra.mxu0 0
    %398 = vmatpush.bf16.xpose.msra.mxu0 0
    %399 = vmatpush.bf16.xpose.msra.mxu0 0
    %400 = vmatpush.bf16.xpose.msra.mxu0 0
    %401 = vmatpush.bf16.xpose.msra.mxu0 0
    %402 = vmatpush.bf16.xpose.msra.mxu0 0
    %403 = vmatpush.bf16.xpose.msra.mxu0 0
    %404 = vmatpush.bf16.xpose.msra.mxu0 %v395
    %405 = vmatmul.bf16.gmra.mxu0 %v392
    %v406 = vpop.f32.mrf.mxu0
    %v407 = vadd.f32 %v166, %v406
    %v408 = vpop.f32.mrf.mxu0
    %v409 = vadd.f32 %v167, %v408
    %410 = vdwg.mxu0
    %v411 = vsel %vm314, %v407, -inf
    %412 = vmax.xlane.f32.xlu0 %v411
    %v413 = vpop.xlane.xlu0 %412
    %v414 = vsel %vm314, %v409, -inf
    %415 = vmax.xlane.f32.xlu0 %v414
    %v416 = vpop.xlane.xlu0 %415
    %v417 = vsub.f32 %v407, %v413
    %v418 = vsub.f32 %v409, %v416
    %v419 = vmul.f32 %v417, 1.442695
    %v420 = vpow.pop %v419
    %v421 = vmul.f32 %v418, 1.442695
    %v422 = vpow.pop %v421
    %v423 = vsel %vm314, %v420, 0.0
    %424 = vadd.xlane.f32.xlu0 %v423
    %v425 = vpop.xlane.xlu0 %424
    %v426 = vsel %vm314, %v422, 0.0
    %427 = vadd.xlane.f32.xlu0 %v426
    %v428 = vpop.xlane.xlu0 %427
    %v429 = vrcp.pop %v425
    %v430 = vmul.f32 %v425, %v429
    %v431 = vsub.f32 1.0, %v430
    %v432 = vmul.f32 %v429, %v431
    %v433 = vadd.f32 %v429, %v432
    %vm434 = vweird.f32 %v425
    %vm435 = vweird.f32 %v429
    %vm436 = vmor %vm434, %vm435
    %v437 = vsel %vm436, %v429, %v433
    %v438 = vand.u32 2147483647, %v425
    %vm439 = vcmp.eq.f32.partialorder %v438, 8.507059e+37
    %v440 = vand.u32 %v425, 2147483648
    %v441 = vor.u32 1.1754944e-38, %v440
    %v442 = vsel %vm439, %v441, %v437
    %v443 = vmul.f32 %v420, %v442
    %v444 = vrcp.pop %v428
    %v445 = vmul.f32 %v428, %v444
    %v446 = vsub.f32 1.0, %v445
    %v447 = vmul.f32 %v444, %v446
    %v448 = vadd.f32 %v444, %v447
    %vm449 = vweird.f32 %v428
    %vm450 = vweird.f32 %v444
    %vm451 = vmor %vm449, %vm450
    %v452 = vsel %vm451, %v444, %v448
    %v453 = vand.u32 2147483647, %v428
    %vm454 = vcmp.eq.f32.partialorder %v453, 8.507059e+37
    %v455 = vand.u32 %v428, 2147483648
    %v456 = vor.u32 1.1754944e-38, %v455
    %v457 = vsel %vm454, %v456, %v452
    %v458 = vmul.f32 %v422, %v457
    %v459 = vadd.f32 %v363, %v443
    %v460 = vadd.f32 %v364, %v458
    %v461 = vpack.c.bf16 %v458, %v443
    %462 = vrot.lane.b32.xlu0 %v290, 56
    %v463 = vpop.permute.xlu0 %462
    %v466 = vsel %vm314, %v461, 0
    %468 = vmatpush.bf16.msra.mxu0 0
    %469 = vmatpush.bf16.msra.mxu0 0
    %470 = vmatpush.bf16.msra.mxu0 0
    %471 = vmatpush.bf16.msra.mxu0 0
    %472 = vmatpush.bf16.msra.mxu0 0
    %473 = vmatpush.bf16.msra.mxu0 0
    %474 = vmatpush.bf16.msra.mxu0 0
    %475 = vmatpush.bf16.msra.mxu0 %v463
    %476 = vmatmul.bf16.gmra.mxu0 %v466
    %v477 = vpop.f32.mrf.mxu0
    %v478 = vadd.f32 0.0, %v477
    %v479 = vpop.f32.mrf.mxu0
    %v480 = vadd.f32 0.0, %v479
    %481 = vdwg.mxu0
    %v482 = vpack.c.bf16 %v480, %v478
    %v484 = vsel %vm293, %v482, 0
    %vm486 = vcmask 1043456
    %v488 = vsel %vm486, %v271, 0
    %490 = vmatpush.bf16.msra.mxu0 0
    %491 = vmatpush.bf16.msra.mxu0 0
    %492 = vmatpush.bf16.msra.mxu0 0
    %493 = vmatpush.bf16.msra.mxu0 0
    %494 = vmatpush.bf16.msra.mxu0 0
    %495 = vmatpush.bf16.msra.mxu0 0
    %496 = vmatpush.bf16.msra.mxu0 0
    %497 = vmatpush.bf16.msra.mxu0 %v488
    %498 = vmatmul.bf16.gmra.mxu0 %v484
    %v499 = vpop.f32.mrf.mxu0
    %v500 = vadd.f32 0.0, %v499
    %v501 = vpop.f32.mrf.mxu0
    %v502 = vadd.f32 0.0, %v501
    %503 = vdwg.mxu0
    %v505 = vsel %vm293, %v386, 0
    %v508 = vsel %vm486, %v270, 0
    %510 = vmatpush.bf16.msra.mxu0 0
    %511 = vmatpush.bf16.msra.mxu0 0
    %512 = vmatpush.bf16.msra.mxu0 0
    %513 = vmatpush.bf16.msra.mxu0 0
    %514 = vmatpush.bf16.msra.mxu0 0
    %515 = vmatpush.bf16.msra.mxu0 0
    %516 = vmatpush.bf16.msra.mxu0 0
    %517 = vmatpush.bf16.msra.mxu0 %v508
    %518 = vmatmul.bf16.gmra.mxu0 %v505
    %v519 = vpop.f32.mrf.mxu0
    %v520 = vadd.f32 %v500, %v519
    %v521 = vpop.f32.mrf.mxu0
    %v522 = vadd.f32 %v502, %v521
    %523 = vdwg.mxu0
    %524 = vrot.lane.b32.xlu0 %v285, 112
    %v525 = vpop.permute.xlu0 %524
    %526 = vrot.lane.b32.xlu0 %v290, 80
    %v527 = vpop.permute.xlu0 %526
    %v529 = vsel %vm293, %v525, 0
    %v532 = vsel %vm293, %v527, 0
    %534 = vmatpush.bf16.xpose.msra.mxu0 0
    %535 = vmatpush.bf16.xpose.msra.mxu0 0
    %536 = vmatpush.bf16.xpose.msra.mxu0 0
    %537 = vmatpush.bf16.xpose.msra.mxu0 0
    %538 = vmatpush.bf16.xpose.msra.mxu0 0
    %539 = vmatpush.bf16.xpose.msra.mxu0 0
    %540 = vmatpush.bf16.xpose.msra.mxu0 0
    %541 = vmatpush.bf16.xpose.msra.mxu0 %v532
    %542 = vmatmul.bf16.gmra.mxu0 %v529
    %v543 = vpop.f32.mrf.mxu0
    %v544 = vadd.f32 %v166, %v543
    %v545 = vpop.f32.mrf.mxu0
    %v546 = vadd.f32 %v167, %v545
    %547 = vdwg.mxu0
    %v548 = vsel %vm314, %v544, -inf
    %549 = vmax.xlane.f32.xlu0 %v548
    %v550 = vpop.xlane.xlu0 %549
    %v551 = vsel %vm314, %v546, -inf
    %552 = vmax.xlane.f32.xlu0 %v551
    %v553 = vpop.xlane.xlu0 %552
    %v554 = vsub.f32 %v544, %v550
    %v555 = vsub.f32 %v546, %v553
    %v556 = vmul.f32 %v554, 1.442695
    %v557 = vpow.pop %v556
    %v558 = vmul.f32 %v555, 1.442695
    %v559 = vpow.pop %v558
    %v560 = vsel %vm314, %v557, 0.0
    %561 = vadd.xlane.f32.xlu0 %v560
    %v562 = vpop.xlane.xlu0 %561
    %v563 = vsel %vm314, %v559, 0.0
    %564 = vadd.xlane.f32.xlu0 %v563
    %v565 = vpop.xlane.xlu0 %564
    %v566 = vrcp.pop %v562
    %v567 = vmul.f32 %v562, %v566
    %v568 = vsub.f32 1.0, %v567
    %v569 = vmul.f32 %v566, %v568
    %v570 = vadd.f32 %v566, %v569
    %vm571 = vweird.f32 %v562
    %vm572 = vweird.f32 %v566
    %vm573 = vmor %vm571, %vm572
    %v574 = vsel %vm573, %v566, %v570
    %v575 = vand.u32 2147483647, %v562
    %vm576 = vcmp.eq.f32.partialorder %v575, 8.507059e+37
    %v577 = vand.u32 %v562, 2147483648
    %v578 = vor.u32 1.1754944e-38, %v577
    %v579 = vsel %vm576, %v578, %v574
    %v580 = vmul.f32 %v557, %v579
    %v581 = vrcp.pop %v565
    %v582 = vmul.f32 %v565, %v581
    %v583 = vsub.f32 1.0, %v582
    %v584 = vmul.f32 %v581, %v583
    %v585 = vadd.f32 %v581, %v584
    %vm586 = vweird.f32 %v565
    %vm587 = vweird.f32 %v581
    %vm588 = vmor %vm586, %vm587
    %v589 = vsel %vm588, %v581, %v585
    %v590 = vand.u32 2147483647, %v565
    %vm591 = vcmp.eq.f32.partialorder %v590, 8.507059e+37
    %v592 = vand.u32 %v565, 2147483648
    %v593 = vor.u32 1.1754944e-38, %v592
    %v594 = vsel %vm591, %v593, %v589
    %v595 = vmul.f32 %v559, %v594
    %v596 = vadd.f32 %v459, %v580
    %v597 = vadd.f32 %v460, %v595
    %v598 = vpack.c.bf16 %v595, %v580
    %599 = vrot.lane.b32.xlu0 %v290, 48
    %v600 = vpop.permute.xlu0 %599
    %v603 = vsel %vm314, %v598, 0
    %605 = vmatpush.bf16.msra.mxu0 0
    %606 = vmatpush.bf16.msra.mxu0 0
    %607 = vmatpush.bf16.msra.mxu0 0
    %608 = vmatpush.bf16.msra.mxu0 0
    %609 = vmatpush.bf16.msra.mxu0 0
    %610 = vmatpush.bf16.msra.mxu0 0
    %611 = vmatpush.bf16.msra.mxu0 0
    %612 = vmatpush.bf16.msra.mxu0 %v600
    %613 = vmatmul.bf16.gmra.mxu0 %v603
    %v614 = vpop.f32.mrf.mxu0
    %v615 = vadd.f32 0.0, %v614
    %v616 = vpop.f32.mrf.mxu0
    %v617 = vadd.f32 0.0, %v616
    %618 = vdwg.mxu0
    %v619 = vpack.c.bf16 %v617, %v615
    %v621 = vsel %vm293, %v619, 0
    %v624 = vsel %vm486, %v272, 0
    %626 = vmatpush.bf16.msra.mxu0 0
    %627 = vmatpush.bf16.msra.mxu0 0
    %628 = vmatpush.bf16.msra.mxu0 0
    %629 = vmatpush.bf16.msra.mxu0 0
    %630 = vmatpush.bf16.msra.mxu0 0
    %631 = vmatpush.bf16.msra.mxu0 0
    %632 = vmatpush.bf16.msra.mxu0 0
    %633 = vmatpush.bf16.msra.mxu0 %v624
    %634 = vmatmul.bf16.gmra.mxu0 %v621
    %v635 = vpop.f32.mrf.mxu0
    %v636 = vadd.f32 0.0, %v635
    %v637 = vpop.f32.mrf.mxu0
    %v638 = vadd.f32 0.0, %v637
    %639 = vdwg.mxu0
    %v640 = vadd.f32 %v520, %v636
    %v641 = vadd.f32 %v522, %v638
    %642 = vrot.lane.b32.xlu0 %v285, 104
    %v643 = vpop.permute.xlu0 %642
    %644 = vrot.lane.b32.xlu0 %v290, 72
    %v645 = vpop.permute.xlu0 %644
    %v647 = vsel %vm293, %v643, 0
    %v650 = vsel %vm293, %v645, 0
    %652 = vmatpush.bf16.xpose.msra.mxu0 0
    %653 = vmatpush.bf16.xpose.msra.mxu0 0
    %654 = vmatpush.bf16.xpose.msra.mxu0 0
    %655 = vmatpush.bf16.xpose.msra.mxu0 0
    %656 = vmatpush.bf16.xpose.msra.mxu0 0
    %657 = vmatpush.bf16.xpose.msra.mxu0 0
    %658 = vmatpush.bf16.xpose.msra.mxu0 0
    %659 = vmatpush.bf16.xpose.msra.mxu0 %v650
    %660 = vmatmul.bf16.gmra.mxu0 %v647
    %v661 = vpop.f32.mrf.mxu0
    %v662 = vadd.f32 %v166, %v661
    %v663 = vpop.f32.mrf.mxu0
    %v664 = vadd.f32 %v167, %v663
    %665 = vdwg.mxu0
    %v666 = vsel %vm314, %v662, -inf
    %667 = vmax.xlane.f32.xlu0 %v666
    %v668 = vpop.xlane.xlu0 %667
    %v669 = vsel %vm314, %v664, -inf
    %670 = vmax.xlane.f32.xlu0 %v669
    %v671 = vpop.xlane.xlu0 %670
    %v672 = vsub.f32 %v662, %v668
    %v673 = vsub.f32 %v664, %v671
    %v674 = vmul.f32 %v672, 1.442695
    %v675 = vpow.pop %v674
    %v676 = vmul.f32 %v673, 1.442695
    %v677 = vpow.pop %v676
    %v678 = vsel %vm314, %v675, 0.0
    %679 = vadd.xlane.f32.xlu0 %v678
    %v680 = vpop.xlane.xlu0 %679
    %v681 = vsel %vm314, %v677, 0.0
    %682 = vadd.xlane.f32.xlu0 %v681
    %v683 = vpop.xlane.xlu0 %682
    %v684 = vrcp.pop %v680
    %v685 = vmul.f32 %v680, %v684
    %v686 = vsub.f32 1.0, %v685
    %v687 = vmul.f32 %v684, %v686
    %v688 = vadd.f32 %v684, %v687
    %vm689 = vweird.f32 %v680
    %vm690 = vweird.f32 %v684
    %vm691 = vmor %vm689, %vm690
    %v692 = vsel %vm691, %v684, %v688
    %v693 = vand.u32 2147483647, %v680
    %vm694 = vcmp.eq.f32.partialorder %v693, 8.507059e+37
    %v695 = vand.u32 %v680, 2147483648
    %v696 = vor.u32 1.1754944e-38, %v695
    %v697 = vsel %vm694, %v696, %v692
    %v698 = vmul.f32 %v675, %v697
    %v699 = vrcp.pop %v683
    %v700 = vmul.f32 %v683, %v699
    %v701 = vsub.f32 1.0, %v700
    %v702 = vmul.f32 %v699, %v701
    %v703 = vadd.f32 %v699, %v702
    %vm704 = vweird.f32 %v683
    %vm705 = vweird.f32 %v699
    %vm706 = vmor %vm704, %vm705
    %v707 = vsel %vm706, %v699, %v703
    %v708 = vand.u32 2147483647, %v683
    %vm709 = vcmp.eq.f32.partialorder %v708, 8.507059e+37
    %v710 = vand.u32 %v683, 2147483648
    %v711 = vor.u32 1.1754944e-38, %v710
    %v712 = vsel %vm709, %v711, %v707
    %v713 = vmul.f32 %v677, %v712
    %v714 = vadd.f32 %v596, %v698
    %v715 = vadd.f32 %v597, %v713
    %v716 = vpack.c.bf16 %v713, %v698
    %717 = vrot.lane.b32.xlu0 %v290, 40
    %v718 = vpop.permute.xlu0 %717
    %v721 = vsel %vm314, %v716, 0
    %723 = vmatpush.bf16.msra.mxu0 0
    %724 = vmatpush.bf16.msra.mxu0 0
    %725 = vmatpush.bf16.msra.mxu0 0
    %726 = vmatpush.bf16.msra.mxu0 0
    %727 = vmatpush.bf16.msra.mxu0 0
    %728 = vmatpush.bf16.msra.mxu0 0
    %729 = vmatpush.bf16.msra.mxu0 0
    %730 = vmatpush.bf16.msra.mxu0 %v718
    %731 = vmatmul.bf16.gmra.mxu0 %v721
    %v732 = vpop.f32.mrf.mxu0
    %v733 = vadd.f32 0.0, %v732
    %v734 = vpop.f32.mrf.mxu0
    %v735 = vadd.f32 0.0, %v734
    %736 = vdwg.mxu0
    %v737 = vpack.c.bf16 %v735, %v733
    %v739 = vsel %vm293, %v737, 0
    %v742 = vsel %vm486, %v273, 0
    %744 = vmatpush.bf16.msra.mxu0 0
    %745 = vmatpush.bf16.msra.mxu0 0
    %746 = vmatpush.bf16.msra.mxu0 0
    %747 = vmatpush.bf16.msra.mxu0 0
    %748 = vmatpush.bf16.msra.mxu0 0
    %749 = vmatpush.bf16.msra.mxu0 0
    %750 = vmatpush.bf16.msra.mxu0 0
    %751 = vmatpush.bf16.msra.mxu0 %v742
    %752 = vmatmul.bf16.gmra.mxu0 %v739
    %v753 = vpop.f32.mrf.mxu0
    %v754 = vadd.f32 0.0, %v753
    %v755 = vpop.f32.mrf.mxu0
    %v756 = vadd.f32 0.0, %v755
    %757 = vdwg.mxu0
    %v758 = vadd.f32 %v640, %v754
    %v759 = vadd.f32 %v641, %v756
    %v761 = vperm.slane %v274, 0
    %v763 = vadd.f32 %v758, %v761
    %v764 = vadd.f32 %v759, %v761
    %v765 = vmul.f32 %v714, 0.25
    %v766 = vmul.f32 %v715, 0.25
    %v767 = vadd.f32 %v133, %v763
    %v768 = vadd.f32 %v134, %v764
    %v769 = vld [vmem:[%s16] sm:$0x1]
    %v770 = vld [vmem:[%s17] sm:$0x1]
    %v771 = vsel %vm170, %v767, 0.0
    %772 = vadd.xlane.f32.xlu0 %v771
    %v773 = vpop.xlane.xlu0 %772
    %v774 = vsel %vm170, %v768, 0.0
    %775 = vadd.xlane.f32.xlu0 %v774
    %v776 = vpop.xlane.xlu0 %775
    %v777 = vmul.f32 %v773, %v183
    %v778 = vmul.f32 %v776, %v183
    %v779 = vsub.f32 %v767, %v777
    %v780 = vsub.f32 %v768, %v778
    %v781 = vmul.f32 %v779, %v779
    %v782 = vmul.f32 %v780, %v780
    %v783 = vsel %vm170, %v781, 0.0
    %784 = vadd.xlane.f32.xlu0 %v783
    %v785 = vpop.xlane.xlu0 %784
    %v786 = vsel %vm170, %v782, 0.0
    %787 = vadd.xlane.f32.xlu0 %v786
    %v788 = vpop.xlane.xlu0 %787
    %v789 = vmul.f32 %v785, %v183
    %v790 = vmul.f32 %v788, %v183
    %v791 = vadd.f32 %v789, 1e-05
    %v792 = vadd.f32 %v790, 1e-05
    %v793 = vrsqrt.pop %v791
    %v794 = vmul.f32 %v793, %v791
    %v795 = vmul.f32 %v794, %v793
    %v796 = vmul.f32 0.5, %v795
    %v797 = vsub.f32 1.5, %v796
    %v798 = vmul.f32 %v793, %v797
    %vm799 = vweird.f32 %v791
    %vm800 = vweird.f32 %v793
    %vm801 = vmor %vm799, %vm800
    %v802 = vsel %vm801, %v793, %v798
    %v803 = vrsqrt.pop %v792
    %v804 = vmul.f32 %v803, %v792
    %v805 = vmul.f32 %v804, %v803
    %v806 = vmul.f32 0.5, %v805
    %v807 = vsub.f32 1.5, %v806
    %v808 = vmul.f32 %v803, %v807
    %vm809 = vweird.f32 %v792
    %vm810 = vweird.f32 %v803
    %vm811 = vmor %vm809, %vm810
    %v812 = vsel %vm811, %v803, %v808
    %v813 = vmul.f32 %v779, %v802
    %v814 = vmul.f32 %v780, %v812
    %v816 = vperm.slane %v769, 0
    %v818 = vmul.f32 %v813, %v816
    %v819 = vmul.f32 %v814, %v816
    %v821 = vperm.slane %v770, 0
    %v823 = vadd.f32 %v818, %v821
    %v824 = vadd.f32 %v819, %v821
    %v825 = vld [vmem:[#allocation5] sm:$0xf]
    %v826 = vld [vmem:[#allocation5 + $0x4] sm:$0xf]
    %v827 = vld [vmem:[#allocation5 + $0x8] sm:$0xf]
    %v828 = vld [vmem:[#allocation5 + $0xc] sm:$0xf]
    %v829 = vpack.c.bf16 %v824, %v823
    %v830 = vld [vmem:[%s7] sm:$0x1]
    %v832 = vperm.slane %v830, 0
    %v838 = vunpack.c.l.b16 %v825
    %v839 = vunpack.c.l.b16 %v826
    %v840 = vunpack.c.l.b16 %v827
    %v841 = vunpack.c.l.b16 %v828
    %v842 = vpack.c.b16 %v839, %v838
    %v843 = vpack.c.b16 %v841, %v840
    %v847 = vsel %vm170, %v829, 0
    %849 = vmatpush.bf16.msra.mxu0 0
    %850 = vmatpush.bf16.msra.mxu0 0
    %851 = vmatpush.bf16.msra.mxu0 0
    %852 = vmatpush.bf16.msra.mxu0 0
    %853 = vmatpush.bf16.msra.mxu0 0
    %854 = vmatpush.bf16.msra.mxu0 0
    %855 = vmatpush.bf16.msra.mxu0 %v843
    %856 = vmatpush.bf16.msra.mxu0 %v842
    %857 = vmatmul.bf16.gmra.mxu0 %v847
    %v858 = vpop.f32.mrf.mxu0
    %v859 = vadd.f32 %v832, %v858
    %v860 = vpop.f32.mrf.mxu0
    %v861 = vadd.f32 %v832, %v860
    %862 = vdwg.mxu0
    %v863 = vpack.c.bf16 %v136, %v135
    %864 = vrot.lane.b32.xlu0 %v842, 96
    %v865 = vpop.permute.xlu0 %864
    %866 = vrot.lane.b32.xlu0 %v843, 96
    %v867 = vpop.permute.xlu0 %866
    %870 = vrot.lane.b32.xlu0 %v832, 96
    %v871 = vpop.permute.xlu0 %870
    %v874 = vsel %vm170, %v863, 0
    %876 = vmatpush.bf16.msra.mxu0 0
    %877 = vmatpush.bf16.msra.mxu0 0
    %878 = vmatpush.bf16.msra.mxu0 0
    %879 = vmatpush.bf16.msra.mxu0 0
    %880 = vmatpush.bf16.msra.mxu0 0
    %881 = vmatpush.bf16.msra.mxu0 0
    %882 = vmatpush.bf16.msra.mxu0 %v867
    %883 = vmatpush.bf16.msra.mxu0 %v865
    %884 = vmatmul.bf16.gmra.mxu0 %v874
    %v885 = vpop.f32.mrf.mxu0
    %v886 = vadd.f32 %v871, %v885
    %v887 = vpop.f32.mrf.mxu0
    %v888 = vadd.f32 %v871, %v887
    %889 = vdwg.mxu0
    %v890 = vld [vmem:[#allocation7] sm:$0xf]
    %v891 = vld [vmem:[#allocation7 + $0x4] sm:$0xf]
    %v892 = vld [vmem:[#allocation7 + $0x8] sm:$0xf]
    %v893 = vld [vmem:[#allocation7 + $0xc] sm:$0xf]
    %v894 = vld [vmem:[%s9] sm:$0x1]
    %v895 = vmul.f32 %v859, 0.35355338
    %v896 = vmul.f32 %v861, 0.35355338
    %v897 = vpack.c.bf16 %v895, %v895
    %v898 = vpack.c.bf16 %v896, %v896
    %v899 = vpack.c.bf16 %v886, %v886
    %v900 = vpack.c.bf16 %v888, %v888
    %v903 = vunpack.c.l.b16 %v897
    %v904 = vunpack.c.l.b16 %v898
    %v905 = vpack.c.b16 %v904, %v903
    %v908 = vunpack.c.l.b16 %v899
    %v909 = vunpack.c.l.b16 %v900
    %v910 = vpack.c.b16 %v909, %v908
    %v912 = vsel %vm293, %v905, 0
    %v915 = vsel %vm293, %v910, 0
    %917 = vmatpush.bf16.xpose.msra.mxu0 0
    %918 = vmatpush.bf16.xpose.msra.mxu0 0
    %919 = vmatpush.bf16.xpose.msra.mxu0 0
    %920 = vmatpush.bf16.xpose.msra.mxu0 0
    %921 = vmatpush.bf16.xpose.msra.mxu0 0
    %922 = vmatpush.bf16.xpose.msra.mxu0 0
    %923 = vmatpush.bf16.xpose.msra.mxu0 0
    %924 = vmatpush.bf16.xpose.msra.mxu0 %v915
    %925 = vmatmul.bf16.gmra.mxu0 %v912
    %v926 = vpop.f32.mrf.mxu0
    %v927 = vadd.f32 %v166, %v926
    %v928 = vpop.f32.mrf.mxu0
    %v929 = vadd.f32 %v167, %v928
    %930 = vdwg.mxu0
    %v931 = vsel %vm314, %v927, -inf
    %932 = vmax.xlane.f32.xlu0 %v931
    %v933 = vpop.xlane.xlu0 %932
    %v934 = vsel %vm314, %v929, -inf
    %935 = vmax.xlane.f32.xlu0 %v934
    %v936 = vpop.xlane.xlu0 %935
    %v937 = vsub.f32 %v927, %v933
    %v938 = vsub.f32 %v929, %v936
    %v939 = vmul.f32 %v937, 1.442695
    %v940 = vpow.pop %v939
    %v941 = vmul.f32 %v938, 1.442695
    %v942 = vpow.pop %v941
    %v943 = vsel %vm314, %v940, 0.0
    %944 = vadd.xlane.f32.xlu0 %v943
    %v945 = vpop.xlane.xlu0 %944
    %v946 = vsel %vm314, %v942, 0.0
    %947 = vadd.xlane.f32.xlu0 %v946
    %v948 = vpop.xlane.xlu0 %947
    %v949 = vrcp.pop %v945
    %v950 = vmul.f32 %v945, %v949
    %v951 = vsub.f32 1.0, %v950
    %v952 = vmul.f32 %v949, %v951
    %v953 = vadd.f32 %v949, %v952
    %vm954 = vweird.f32 %v945
    %vm955 = vweird.f32 %v949
    %vm956 = vmor %vm954, %vm955
    %v957 = vsel %vm956, %v949, %v953
    %v958 = vand.u32 2147483647, %v945
    %vm959 = vcmp.eq.f32.partialorder %v958, 8.507059e+37
    %v960 = vand.u32 %v945, 2147483648
    %v961 = vor.u32 1.1754944e-38, %v960
    %v962 = vsel %vm959, %v961, %v957
    %v963 = vmul.f32 %v940, %v962
    %v964 = vrcp.pop %v948
    %v965 = vmul.f32 %v948, %v964
    %v966 = vsub.f32 1.0, %v965
    %v967 = vmul.f32 %v964, %v966
    %v968 = vadd.f32 %v964, %v967
    %vm969 = vweird.f32 %v948
    %vm970 = vweird.f32 %v964
    %vm971 = vmor %vm969, %vm970
    %v972 = vsel %vm971, %v964, %v968
    %v973 = vand.u32 2147483647, %v948
    %vm974 = vcmp.eq.f32.partialorder %v973, 8.507059e+37
    %v975 = vand.u32 %v948, 2147483648
    %v976 = vor.u32 1.1754944e-38, %v975
    %v977 = vsel %vm974, %v976, %v972
    %v978 = vmul.f32 %v942, %v977
    %v979 = vadd.f32 %v963, 0.0
    %v980 = vadd.f32 %v978, 0.0
    %v981 = vpack.c.bf16 %v978, %v963
    %982 = vrot.lane.b32.xlu0 %v910, 96
    %v983 = vpop.permute.xlu0 %982
    %v986 = vsel %vm314, %v981, 0
    %988 = vmatpush.bf16.msra.mxu0 0
    %989 = vmatpush.bf16.msra.mxu0 0
    %990 = vmatpush.bf16.msra.mxu0 0
    %991 = vmatpush.bf16.msra.mxu0 0
    %992 = vmatpush.bf16.msra.mxu0 0
    %993 = vmatpush.bf16.msra.mxu0 0
    %994 = vmatpush.bf16.msra.mxu0 0
    %995 = vmatpush.bf16.msra.mxu0 %v983
    %996 = vmatmul.bf16.gmra.mxu0 %v986
    %v997 = vpop.f32.mrf.mxu0
    %v998 = vadd.f32 0.0, %v997
    %v999 = vpop.f32.mrf.mxu0
    %v1000 = vadd.f32 0.0, %v999
    %1001 = vdwg.mxu0
    %v1002 = vpack.c.bf16 %v1000, %v998
    %1003 = vrot.lane.b32.xlu0 %v905, 120
    %v1004 = vpop.permute.xlu0 %1003
    %1005 = vrot.lane.b32.xlu0 %v910, 120
    %v1006 = vpop.permute.xlu0 %1005
    %v1008 = vsel %vm293, %v1004, 0
    %v1011 = vsel %vm293, %v1006, 0
    %1013 = vmatpush.bf16.xpose.msra.mxu0 0
    %1014 = vmatpush.bf16.xpose.msra.mxu0 0
    %1015 = vmatpush.bf16.xpose.msra.mxu0 0
    %1016 = vmatpush.bf16.xpose.msra.mxu0 0
    %1017 = vmatpush.bf16.xpose.msra.mxu0 0
    %1018 = vmatpush.bf16.xpose.msra.mxu0 0
    %1019 = vmatpush.bf16.xpose.msra.mxu0 0
    %1020 = vmatpush.bf16.xpose.msra.mxu0 %v1011
    %1021 = vmatmul.bf16.gmra.mxu0 %v1008
    %v1022 = vpop.f32.mrf.mxu0
    %v1023 = vadd.f32 %v166, %v1022
    %v1024 = vpop.f32.mrf.mxu0
    %v1025 = vadd.f32 %v167, %v1024
    %1026 = vdwg.mxu0
    %v1027 = vsel %vm314, %v1023, -inf
    %1028 = vmax.xlane.f32.xlu0 %v1027
    %v1029 = vpop.xlane.xlu0 %1028
    %v1030 = vsel %vm314, %v1025, -inf
    %1031 = vmax.xlane.f32.xlu0 %v1030
    %v1032 = vpop.xlane.xlu0 %1031
    %v1033 = vsub.f32 %v1023, %v1029
    %v1034 = vsub.f32 %v1025, %v1032
    %v1035 = vmul.f32 %v1033, 1.442695
    %v1036 = vpow.pop %v1035
    %v1037 = vmul.f32 %v1034, 1.442695
    %v1038 = vpow.pop %v1037
    %v1039 = vsel %vm314, %v1036, 0.0
    %1040 = vadd.xlane.f32.xlu0 %v1039
    %v1041 = vpop.xlane.xlu0 %1040
    %v1042 = vsel %vm314, %v1038, 0.0
    %1043 = vadd.xlane.f32.xlu0 %v1042
    %v1044 = vpop.xlane.xlu0 %1043
    %v1045 = vrcp.pop %v1041
    %v1046 = vmul.f32 %v1041, %v1045
    %v1047 = vsub.f32 1.0, %v1046
    %v1048 = vmul.f32 %v1045, %v1047
    %v1049 = vadd.f32 %v1045, %v1048
    %vm1050 = vweird.f32 %v1041
    %vm1051 = vweird.f32 %v1045
    %vm1052 = vmor %vm1050, %vm1051
    %v1053 = vsel %vm1052, %v1045, %v1049
    %v1054 = vand.u32 2147483647, %v1041
    %vm1055 = vcmp.eq.f32.partialorder %v1054, 8.507059e+37
    %v1056 = vand.u32 %v1041, 2147483648
    %v1057 = vor.u32 1.1754944e-38, %v1056
    %v1058 = vsel %vm1055, %v1057, %v1053
    %v1059 = vmul.f32 %v1036, %v1058
    %v1060 = vrcp.pop %v1044
    %v1061 = vmul.f32 %v1044, %v1060
    %v1062 = vsub.f32 1.0, %v1061
    %v1063 = vmul.f32 %v1060, %v1062
    %v1064 = vadd.f32 %v1060, %v1063
    %vm1065 = vweird.f32 %v1044
    %vm1066 = vweird.f32 %v1060
    %vm1067 = vmor %vm1065, %vm1066
    %v1068 = vsel %vm1067, %v1060, %v1064
    %v1069 = vand.u32 2147483647, %v1044
    %vm1070 = vcmp.eq.f32.partialorder %v1069, 8.507059e+37
    %v1071 = vand.u32 %v1044, 2147483648
    %v1072 = vor.u32 1.1754944e-38, %v1071
    %v1073 = vsel %vm1070, %v1072, %v1068
    %v1074 = vmul.f32 %v1038, %v1073
    %v1075 = vadd.f32 %v979, %v1059
    %v1076 = vadd.f32 %v980, %v1074
    %v1077 = vpack.c.bf16 %v1074, %v1059
    %1078 = vrot.lane.b32.xlu0 %v910, 88
    %v1079 = vpop.permute.xlu0 %1078
    %v1082 = vsel %vm314, %v1077, 0
    %1084 = vmatpush.bf16.msra.mxu0 0
    %1085 = vmatpush.bf16.msra.mxu0 0
    %1086 = vmatpush.bf16.msra.mxu0 0
    %1087 = vmatpush.bf16.msra.mxu0 0
    %1088 = vmatpush.bf16.msra.mxu0 0
    %1089 = vmatpush.bf16.msra.mxu0 0
    %1090 = vmatpush.bf16.msra.mxu0 0
    %1091 = vmatpush.bf16.msra.mxu0 %v1079
    %1092 = vmatmul.bf16.gmra.mxu0 %v1082
    %v1093 = vpop.f32.mrf.mxu0
    %v1094 = vadd.f32 0.0, %v1093
    %v1095 = vpop.f32.mrf.mxu0
    %v1096 = vadd.f32 0.0, %v1095
    %1097 = vdwg.mxu0
    %v1098 = vpack.c.bf16 %v1096, %v1094
    %v1100 = vsel %vm293, %v1098, 0
    %v1103 = vsel %vm486, %v891, 0
    %1105 = vmatpush.bf16.msra.mxu0 0
    %1106 = vmatpush.bf16.msra.mxu0 0
    %1107 = vmatpush.bf16.msra.mxu0 0
    %1108 = vmatpush.bf16.msra.mxu0 0
    %1109 = vmatpush.bf16.msra.mxu0 0
    %1110 = vmatpush.bf16.msra.mxu0 0
    %1111 = vmatpush.bf16.msra.mxu0 0
    %1112 = vmatpush.bf16.msra.mxu0 %v1103
    %1113 = vmatmul.bf16.gmra.mxu0 %v1100
    %v1114 = vpop.f32.mrf.mxu0
    %v1115 = vadd.f32 0.0, %v1114
    %v1116 = vpop.f32.mrf.mxu0
    %v1117 = vadd.f32 0.0, %v1116
    %1118 = vdwg.mxu0
    %v1120 = vsel %vm293, %v1002, 0
    %v1123 = vsel %vm486, %v890, 0
    %1125 = vmatpush.bf16.msra.mxu0 0
    %1126 = vmatpush.bf16.msra.mxu0 0
    %1127 = vmatpush.bf16.msra.mxu0 0
    %1128 = vmatpush.bf16.msra.mxu0 0
    %1129 = vmatpush.bf16.msra.mxu0 0
    %1130 = vmatpush.bf16.msra.mxu0 0
    %1131 = vmatpush.bf16.msra.mxu0 0
    %1132 = vmatpush.bf16.msra.mxu0 %v1123
    %1133 = vmatmul.bf16.gmra.mxu0 %v1120
    %v1134 = vpop.f32.mrf.mxu0
    %v1135 = vadd.f32 %v1115, %v1134
    %v1136 = vpop.f32.mrf.mxu0
    %v1137 = vadd.f32 %v1117, %v1136
    %1138 = vdwg.mxu0
    %1139 = vrot.lane.b32.xlu0 %v905, 112
    %v1140 = vpop.permute.xlu0 %1139
    %1141 = vrot.lane.b32.xlu0 %v910, 112
    %v1142 = vpop.permute.xlu0 %1141
    %v1144 = vsel %vm293, %v1140, 0
    %v1147 = vsel %vm293, %v1142, 0
    %1149 = vmatpush.bf16.xpose.msra.mxu0 0
    %1150 = vmatpush.bf16.xpose.msra.mxu0 0
    %1151 = vmatpush.bf16.xpose.msra.mxu0 0
    %1152 = vmatpush.bf16.xpose.msra.mxu0 0
    %1153 = vmatpush.bf16.xpose.msra.mxu0 0
    %1154 = vmatpush.bf16.xpose.msra.mxu0 0
    %1155 = vmatpush.bf16.xpose.msra.mxu0 0
    %1156 = vmatpush.bf16.xpose.msra.mxu0 %v1147
    %1157 = vmatmul.bf16.gmra.mxu0 %v1144
    %v1158 = vpop.f32.mrf.mxu0
    %v1159 = vadd.f32 %v166, %v1158
    %v1160 = vpop.f32.mrf.mxu0
    %v1161 = vadd.f32 %v167, %v1160
    %1162 = vdwg.mxu0
    %v1163 = vsel %vm314, %v1159, -inf
    %1164 = vmax.xlane.f32.xlu0 %v1163
    %v1165 = vpop.xlane.xlu0 %1164
    %v1166 = vsel %vm314, %v1161, -inf
    %1167 = vmax.xlane.f32.xlu0 %v1166
    %v1168 = vpop.xlane.xlu0 %1167
    %v1169 = vsub.f32 %v1159, %v1165
    %v1170 = vsub.f32 %v1161, %v1168
    %v1171 = vmul.f32 %v1169, 1.442695
    %v1172 = vpow.pop %v1171
    %v1173 = vmul.f32 %v1170, 1.442695
    %v1174 = vpow.pop %v1173
    %v1175 = vsel %vm314, %v1172, 0.0
    %1176 = vadd.xlane.f32.xlu0 %v1175
    %v1177 = vpop.xlane.xlu0 %1176
    %v1178 = vsel %vm314, %v1174, 0.0
    %1179 = vadd.xlane.f32.xlu0 %v1178
    %v1180 = vpop.xlane.xlu0 %1179
    %v1181 = vrcp.pop %v1177
    %v1182 = vmul.f32 %v1177, %v1181
    %v1183 = vsub.f32 1.0, %v1182
    %v1184 = vmul.f32 %v1181, %v1183
    %v1185 = vadd.f32 %v1181, %v1184
    %vm1186 = vweird.f32 %v1177
    %vm1187 = vweird.f32 %v1181
    %vm1188 = vmor %vm1186, %vm1187
    %v1189 = vsel %vm1188, %v1181, %v1185
    %v1190 = vand.u32 2147483647, %v1177
    %vm1191 = vcmp.eq.f32.partialorder %v1190, 8.507059e+37
    %v1192 = vand.u32 %v1177, 2147483648
    %v1193 = vor.u32 1.1754944e-38, %v1192
    %v1194 = vsel %vm1191, %v1193, %v1189
    %v1195 = vmul.f32 %v1172, %v1194
    %v1196 = vrcp.pop %v1180
    %v1197 = vmul.f32 %v1180, %v1196
    %v1198 = vsub.f32 1.0, %v1197
    %v1199 = vmul.f32 %v1196, %v1198
    %v1200 = vadd.f32 %v1196, %v1199
    %vm1201 = vweird.f32 %v1180
    %vm1202 = vweird.f32 %v1196
    %vm1203 = vmor %vm1201, %vm1202
    %v1204 = vsel %vm1203, %v1196, %v1200
    %v1205 = vand.u32 2147483647, %v1180
    %vm1206 = vcmp.eq.f32.partialorder %v1205, 8.507059e+37
    %v1207 = vand.u32 %v1180, 2147483648
    %v1208 = vor.u32 1.1754944e-38, %v1207
    %v1209 = vsel %vm1206, %v1208, %v1204
    %v1210 = vmul.f32 %v1174, %v1209
    %v1211 = vadd.f32 %v1075, %v1195
    %v1212 = vadd.f32 %v1076, %v1210
    %v1213 = vpack.c.bf16 %v1210, %v1195
    %1214 = vrot.lane.b32.xlu0 %v910, 80
    %v1215 = vpop.permute.xlu0 %1214
    %v1218 = vsel %vm314, %v1213, 0
    %1220 = vmatpush.bf16.msra.mxu0 0
    %1221 = vmatpush.bf16.msra.mxu0 0
    %1222 = vmatpush.bf16.msra.mxu0 0
    %1223 = vmatpush.bf16.msra.mxu0 0
    %1224 = vmatpush.bf16.msra.mxu0 0
    %1225 = vmatpush.bf16.msra.mxu0 0
    %1226 = vmatpush.bf16.msra.mxu0 0
    %1227 = vmatpush.bf16.msra.mxu0 %v1215
    %1228 = vmatmul.bf16.gmra.mxu0 %v1218
    %v1229 = vpop.f32.mrf.mxu0
    %v1230 = vadd.f32 0.0, %v1229
    %v1231 = vpop.f32.mrf.mxu0
    %v1232 = vadd.f32 0.0, %v1231
    %1233 = vdwg.mxu0
    %v1234 = vpack.c.bf16 %v1232, %v1230
    %v1236 = vsel %vm293, %v1234, 0
    %v1239 = vsel %vm486, %v892, 0
    %1241 = vmatpush.bf16.msra.mxu0 0
    %1242 = vmatpush.bf16.msra.mxu0 0
    %1243 = vmatpush.bf16.msra.mxu0 0
    %1244 = vmatpush.bf16.msra.mxu0 0
    %1245 = vmatpush.bf16.msra.mxu0 0
    %1246 = vmatpush.bf16.msra.mxu0 0
    %1247 = vmatpush.bf16.msra.mxu0 0
    %1248 = vmatpush.bf16.msra.mxu0 %v1239
    %1249 = vmatmul.bf16.gmra.mxu0 %v1236
    %v1250 = vpop.f32.mrf.mxu0
    %v1251 = vadd.f32 0.0, %v1250
    %v1252 = vpop.f32.mrf.mxu0
    %v1253 = vadd.f32 0.0, %v1252
    %1254 = vdwg.mxu0
    %v1255 = vadd.f32 %v1135, %v1251
    %v1256 = vadd.f32 %v1137, %v1253
    %1257 = vrot.lane.b32.xlu0 %v905, 104
    %v1258 = vpop.permute.xlu0 %1257
    %1259 = vrot.lane.b32.xlu0 %v910, 104
    %v1260 = vpop.permute.xlu0 %1259
    %v1262 = vsel %vm293, %v1258, 0
    %v1265 = vsel %vm293, %v1260, 0
    %1267 = vmatpush.bf16.xpose.msra.mxu0 0
    %1268 = vmatpush.bf16.xpose.msra.mxu0 0
    %1269 = vmatpush.bf16.xpose.msra.mxu0 0
    %1270 = vmatpush.bf16.xpose.msra.mxu0 0
    %1271 = vmatpush.bf16.xpose.msra.mxu0 0
    %1272 = vmatpush.bf16.xpose.msra.mxu0 0
    %1273 = vmatpush.bf16.xpose.msra.mxu0 0
    %1274 = vmatpush.bf16.xpose.msra.mxu0 %v1265
    %1275 = vmatmul.bf16.gmra.mxu0 %v1262
    %v1276 = vpop.f32.mrf.mxu0
    %v1277 = vadd.f32 %v166, %v1276
    %v1278 = vpop.f32.mrf.mxu0
    %v1279 = vadd.f32 %v167, %v1278
    %1280 = vdwg.mxu0
    %v1281 = vsel %vm314, %v1277, -inf
    %1282 = vmax.xlane.f32.xlu0 %v1281
    %v1283 = vpop.xlane.xlu0 %1282
    %v1284 = vsel %vm314, %v1279, -inf
    %1285 = vmax.xlane.f32.xlu0 %v1284
    %v1286 = vpop.xlane.xlu0 %1285
    %v1287 = vsub.f32 %v1277, %v1283
    %v1288 = vsub.f32 %v1279, %v1286
    %v1289 = vmul.f32 %v1287, 1.442695
    %v1290 = vpow.pop %v1289
    %v1291 = vmul.f32 %v1288, 1.442695
    %v1292 = vpow.pop %v1291
    %v1293 = vsel %vm314, %v1290, 0.0
    %1294 = vadd.xlane.f32.xlu0 %v1293
    %v1295 = vpop.xlane.xlu0 %1294
    %v1296 = vsel %vm314, %v1292, 0.0
    %1297 = vadd.xlane.f32.xlu0 %v1296
    %v1298 = vpop.xlane.xlu0 %1297
    %v1299 = vrcp.pop %v1295
    %v1300 = vmul.f32 %v1295, %v1299
    %v1301 = vsub.f32 1.0, %v1300
    %v1302 = vmul.f32 %v1299, %v1301
    %v1303 = vadd.f32 %v1299, %v1302
    %vm1304 = vweird.f32 %v1295
    %vm1305 = vweird.f32 %v1299
    %vm1306 = vmor %vm1304, %vm1305
    %v1307 = vsel %vm1306, %v1299, %v1303
    %v1308 = vand.u32 2147483647, %v1295
    %vm1309 = vcmp.eq.f32.partialorder %v1308, 8.507059e+37
    %v1310 = vand.u32 %v1295, 2147483648
    %v1311 = vor.u32 1.1754944e-38, %v1310
    %v1312 = vsel %vm1309, %v1311, %v1307
    %v1313 = vmul.f32 %v1290, %v1312
    %v1314 = vrcp.pop %v1298
    %v1315 = vmul.f32 %v1298, %v1314
    %v1316 = vsub.f32 1.0, %v1315
    %v1317 = vmul.f32 %v1314, %v1316
    %v1318 = vadd.f32 %v1314, %v1317
    %vm1319 = vweird.f32 %v1298
    %vm1320 = vweird.f32 %v1314
    %vm1321 = vmor %vm1319, %vm1320
    %v1322 = vsel %vm1321, %v1314, %v1318
    %v1323 = vand.u32 2147483647, %v1298
    %vm1324 = vcmp.eq.f32.partialorder %v1323, 8.507059e+37
    %v1325 = vand.u32 %v1298, 2147483648
    %v1326 = vor.u32 1.1754944e-38, %v1325
    %v1327 = vsel %vm1324, %v1326, %v1322
    %v1328 = vmul.f32 %v1292, %v1327
    %v1329 = vadd.f32 %v1211, %v1313
    %v1330 = vadd.f32 %v1212, %v1328
    %v1331 = vpack.c.bf16 %v1328, %v1313
    %1332 = vrot.lane.b32.xlu0 %v910, 72
    %v1333 = vpop.permute.xlu0 %1332
    %v1336 = vsel %vm314, %v1331, 0
    %1338 = vmatpush.bf16.msra.mxu0 0
    %1339 = vmatpush.bf16.msra.mxu0 0
    %1340 = vmatpush.bf16.msra.mxu0 0
    %1341 = vmatpush.bf16.msra.mxu0 0
    %1342 = vmatpush.bf16.msra.mxu0 0
    %1343 = vmatpush.bf16.msra.mxu0 0
    %1344 = vmatpush.bf16.msra.mxu0 0
    %1345 = vmatpush.bf16.msra.mxu0 %v1333
    %1346 = vmatmul.bf16.gmra.mxu0 %v1336
    %v1347 = vpop.f32.mrf.mxu0
    %v1348 = vadd.f32 0.0, %v1347
    %v1349 = vpop.f32.mrf.mxu0
    %v1350 = vadd.f32 0.0, %v1349
    %1351 = vdwg.mxu0
    %v1352 = vpack.c.bf16 %v1350, %v1348
    %v1354 = vsel %vm293, %v1352, 0
    %v1357 = vsel %vm486, %v893, 0
    %1359 = vmatpush.bf16.msra.mxu0 0
    %1360 = vmatpush.bf16.msra.mxu0 0
    %1361 = vmatpush.bf16.msra.mxu0 0
    %1362 = vmatpush.bf16.msra.mxu0 0
    %1363 = vmatpush.bf16.msra.mxu0 0
    %1364 = vmatpush.bf16.msra.mxu0 0
    %1365 = vmatpush.bf16.msra.mxu0 0
    %1366 = vmatpush.bf16.msra.mxu0 %v1357
    %1367 = vmatmul.bf16.gmra.mxu0 %v1354
    %v1368 = vpop.f32.mrf.mxu0
    %v1369 = vadd.f32 0.0, %v1368
    %v1370 = vpop.f32.mrf.mxu0
    %v1371 = vadd.f32 0.0, %v1370
    %1372 = vdwg.mxu0
    %v1373 = vadd.f32 %v1255, %v1369
    %v1374 = vadd.f32 %v1256, %v1371
    %v1376 = vperm.slane %v894, 0
    %v1378 = vadd.f32 %v1373, %v1376
    %v1379 = vadd.f32 %v1374, %v1376
    %v1380 = vmul.f32 %v1329, 0.25
    %v1381 = vmul.f32 %v1330, 0.25
    %v1382 = vadd.f32 %v767, %v1378
    %v1383 = vadd.f32 %v768, %v1379
    %v1384 = vld [vmem:[%s18] sm:$0x1]
    %v1385 = vld [vmem:[%s19] sm:$0x1]
    %v1386 = vsel %vm170, %v1382, 0.0
    %1387 = vadd.xlane.f32.xlu0 %v1386
    %v1388 = vpop.xlane.xlu0 %1387
    %v1389 = vsel %vm170, %v1383, 0.0
    %1390 = vadd.xlane.f32.xlu0 %v1389
    %v1391 = vpop.xlane.xlu0 %1390
    %v1392 = vmul.f32 %v1388, %v183
    %v1393 = vmul.f32 %v1391, %v183
    %v1394 = vsub.f32 %v1382, %v1392
    %v1395 = vsub.f32 %v1383, %v1393
    %v1396 = vmul.f32 %v1394, %v1394
    %v1397 = vmul.f32 %v1395, %v1395
    %v1398 = vsel %vm170, %v1396, 0.0
    %1399 = vadd.xlane.f32.xlu0 %v1398
    %v1400 = vpop.xlane.xlu0 %1399
    %v1401 = vsel %vm170, %v1397, 0.0
    %1402 = vadd.xlane.f32.xlu0 %v1401
    %v1403 = vpop.xlane.xlu0 %1402
    %v1404 = vmul.f32 %v1400, %v183
    %v1405 = vmul.f32 %v1403, %v183
    %v1406 = vadd.f32 %v1404, 1e-05
    %v1407 = vadd.f32 %v1405, 1e-05
    %v1408 = vrsqrt.pop %v1406
    %v1409 = vmul.f32 %v1408, %v1406
    %v1410 = vmul.f32 %v1409, %v1408
    %v1411 = vmul.f32 0.5, %v1410
    %v1412 = vsub.f32 1.5, %v1411
    %v1413 = vmul.f32 %v1408, %v1412
    %vm1414 = vweird.f32 %v1406
    %vm1415 = vweird.f32 %v1408
    %vm1416 = vmor %vm1414, %vm1415
    %v1417 = vsel %vm1416, %v1408, %v1413
    %v1418 = vrsqrt.pop %v1407
    %v1419 = vmul.f32 %v1418, %v1407
    %v1420 = vmul.f32 %v1419, %v1418
    %v1421 = vmul.f32 0.5, %v1420
    %v1422 = vsub.f32 1.5, %v1421
    %v1423 = vmul.f32 %v1418, %v1422
    %vm1424 = vweird.f32 %v1407
    %vm1425 = vweird.f32 %v1418
    %vm1426 = vmor %vm1424, %vm1425
    %v1427 = vsel %vm1426, %v1418, %v1423
    %v1428 = vmul.f32 %v1394, %v1417
    %v1429 = vmul.f32 %v1395, %v1427
    %v1431 = vperm.slane %v1384, 0
    %v1433 = vmul.f32 %v1428, %v1431
    %v1434 = vmul.f32 %v1429, %v1431
    %v1436 = vperm.slane %v1385, 0
    %v1438 = vadd.f32 %v1433, %v1436
    %v1439 = vadd.f32 %v1434, %v1436
    %v1440 = vpack.c.bf16 %v1439, %v1438
    %v1441 = vld [vmem:[#allocation8] sm:$0xf]
    %v1442 = vld [vmem:[#allocation8 + $0x4] sm:$0xf]
    %v1443 = vld [vmem:[#allocation8 + $0x8] sm:$0xf]
    %v1444 = vld [vmem:[#allocation8 + $0xc] sm:$0xf]
    %v1445 = vld [vmem:[%s11] sm:$0x1]
    %v1447 = vperm.slane %v1445, 0
    %v1453 = vunpack.c.l.b16 %v1441
    %v1454 = vunpack.c.l.b16 %v1442
    %v1455 = vunpack.c.l.b16 %v1443
    %v1456 = vunpack.c.l.b16 %v1444
    %v1457 = vpack.c.b16 %v1454, %v1453
    %v1458 = vpack.c.b16 %v1456, %v1455
    %v1462 = vsel %vm170, %v1440, 0
    %1464 = vmatpush.bf16.msra.mxu0 0
    %1465 = vmatpush.bf16.msra.mxu0 0
    %1466 = vmatpush.bf16.msra.mxu0 0
    %1467 = vmatpush.bf16.msra.mxu0 0
    %1468 = vmatpush.bf16.msra.mxu0 0
    %1469 = vmatpush.bf16.msra.mxu0 0
    %1470 = vmatpush.bf16.msra.mxu0 %v1458
    %1471 = vmatpush.bf16.msra.mxu0 %v1457
    %1472 = vmatmul.bf16.gmra.mxu0 %v1462
    %v1473 = vpop.f32.mrf.mxu0
    %v1474 = vadd.f32 %v1447, %v1473
    %v1475 = vpop.f32.mrf.mxu0
    %v1476 = vadd.f32 %v1447, %v1475
    %1477 = vdwg.mxu0
    %v1478 = vmax.f32 %v1474, 0.0
    %v1479 = vmax.f32 %v1476, 0.0
    %v1480 = vpack.c.bf16 %v1479, %v1478
    %v1481 = vld [vmem:[%s12] sm:$0xf]
    %v1482 = vld [vmem:[%s12 + $0x4] sm:$0xf]
    %v1483 = vld [vmem:[%s12 + $0x8] sm:$0xf]
    %v1484 = vld [vmem:[%s12 + $0xc] sm:$0xf]
    %v1485 = vld [vmem:[%s12 + $0x10] sm:$0xf]
    %v1486 = vld [vmem:[%s12 + $0x14] sm:$0xf]
    %v1487 = vld [vmem:[%s12 + $0x18] sm:$0xf]
    %v1488 = vld [vmem:[%s12 + $0x1c] sm:$0xf]
    %v1489 = vld [vmem:[%s13] sm:$0x1]
    %v1491 = vperm.slane %v1489, 0
    %v1501 = vunpack.c.l.b16 %v1481
    %v1502 = vunpack.c.l.b16 %v1482
    %v1503 = vunpack.c.l.b16 %v1483
    %v1504 = vunpack.c.l.b16 %v1484
    %v1505 = vunpack.c.l.b16 %v1485
    %v1506 = vunpack.c.l.b16 %v1486
    %v1507 = vunpack.c.l.b16 %v1487
    %v1508 = vunpack.c.l.b16 %v1488
    %v1509 = vpack.c.b16 %v1502, %v1501
    %v1510 = vpack.c.b16 %v1504, %v1503
    %v1511 = vpack.c.b16 %v1506, %v1505
    %v1512 = vpack.c.b16 %v1508, %v1507
    %vm1517 = vcmask 523264
    %v1519 = vsel %vm1517, %v1480, 0
    %1521 = vmatpush.bf16.msra.mxu0 0
    %1522 = vmatpush.bf16.msra.mxu0 0
    %1523 = vmatpush.bf16.msra.mxu0 0
    %1524 = vmatpush.bf16.msra.mxu0 0
    %1525 = vmatpush.bf16.msra.mxu0 %v1512
    %1526 = vmatpush.bf16.msra.mxu0 %v1511
    %1527 = vmatpush.bf16.msra.mxu0 %v1510
    %1528 = vmatpush.bf16.msra.mxu0 %v1509
    %1529 = vmatmul.bf16.gmra.mxu0 %v1519
    %v1530 = vpop.f32.mrf.mxu0
    %v1531 = vadd.f32 %v1491, %v1530
    %v1532 = vpop.f32.mrf.mxu0
    %v1533 = vadd.f32 %v1491, %v1532
    %1534 = vdwg.mxu0
    %v1535 = vadd.f32 %v1382, %v1531
    %v1536 = vadd.f32 %v1383, %v1533
    %1537 = vst.msk [vmem:[#allocation10] sm:$0xff] %vm170, %v1535
    %1538 = vst.msk [vmem:[#allocation10 + $0x8] sm:$0xff] %vm170, %v1536
    %1540 = vrot.lane.b32.xlu0 %v1380, 8
    %v1541 = vpop.permute.xlu0 %1540
    %v1543 = vsel %vm293, %v765, %v1541
    %1544 = vst.msk [vmem:[#allocation11] sm:$0xff] %vm314, %v1543
    %1546 = vrot.lane.b32.xlu0 %v766, 120
    %v1547 = vpop.permute.xlu0 %1546
    %v1549 = vsel %vm293, %v1547, %v1381
    %1550 = vst.msk [vmem:[#allocation11 + $0x8] sm:$0xff] %vm314, %v1549
    // Predicated region
    $region98: #{tpu_custom_call.1} parent=1 // pred_check
      _
    $region99: #{tpu_custom_call.1} parent=1 // pred_check_branch
      %1552 = sbr.rel (0) target = $region101
    $region100: #{tpu_custom_call.1} parent=1 // pred_region
      %1554 = vsyncadd [#allocation4], 0
      %s1555 = sshll.u32 [#allocation10], 4
      %s1556 = int_to_ptr.vmem [resolvable:$true] %s1555
      %s1557 = sshll.u32 %s20, 4
      %s1558 = int_to_ptr.hbm [resolvable:$true] %s1557
      %1563 = dma.vmem_to_hbm [thread:$0]  %s1556, 256, %s1558, [#allocation4], 128, 128, 8
    $region101: #{tpu_custom_call.1} parent=1 // pred_fallthru
      _
    // Predicated region
    $region102: #{tpu_custom_call.1} parent=1 // pred_check
      _
    $region103: #{tpu_custom_call.1} parent=1 // pred_check_branch
      %1565 = sbr.rel (0) target = $region105
    $region104: #{tpu_custom_call.1} parent=1 // pred_region
      %1567 = vsyncadd [#allocation12], 0
      %s1568 = sshll.u32 [#allocation11], 4
      %s1569 = int_to_ptr.vmem [resolvable:$true] %s1568
      %s1570 = sshll.u32 %s21, 4
      %s1571 = int_to_ptr.hbm [resolvable:$true] %s1570
      %1576 = dma.vmem_to_hbm [thread:$0]  %s1569, 256, %s1571, [#allocation12], 128, 128, 8
    $region105: #{tpu_custom_call.1} parent=1 // pred_fallthru
      _
    // Predicated region
    $region106: #{tpu_custom_call.1} parent=1 // pred_check
      _
    $region107: #{tpu_custom_call.1} parent=1 // pred_check_branch
      %1578 = sbr.rel (0) target = $region109
    $region108: #{tpu_custom_call.1} parent=1 // pred_region
      %1580 = dma.done [#allocation4], 256
    $region109: #{tpu_custom_call.1} parent=1 // pred_fallthru
      _
    // Predicated region
    $region110: #{tpu_custom_call.1} parent=1 // pred_check
      _
    $region111: #{tpu_custom_call.1} parent=1 // pred_check_branch
      %1582 = sbr.rel (0) target = $region113
    $region112: #{tpu_custom_call.1} parent=1 // pred_region
      %1584 = dma.done [#allocation12], 256
    $region113: #{tpu_custom_call.1} parent=1 // pred_fallthru
      _
    %1585 = vsyncpa [#allocation3], 1
    %1586 = vsyncpa [#allocation6], 1
    %1587 = vsyncpa [#allocation9], 1
    %1588 = vsyncpa [#allocation4], 1
    %1589 = vsyncpa [#allocation12], 1

</llo_original>
